<compile_context>
chip_gen: v7x
topology: tpu7x:2x2x1
jax: 0.10.0
libtpu: 0.0.40
codegen_flags: <defaults>
</compile_context>

<pallas_src>
import jax
import jax.numpy as jnp
from jax.experimental import pallas as pl
from jax.experimental.pallas import tpu as pltpu

LAYER_SIZES = [784, 200, 100, 60, 30, 10]
# Lane-padded widths (multiples of 128) for every hidden / output dim.
PADDED_SIZES = [784, 256, 128, 128, 128, 128]
NUM_CLASSES = LAYER_SIZES[-1]
OUT_PAD = PADDED_SIZES[-1]


def _round_up(x, m):
    return (x + m - 1) // m * m


def mlp_kernel(x_ref,
               w1_ref, b1_ref,
               w2_ref, b2_ref,
               w3_ref, b3_ref,
               w4_ref, b4_ref,
               w5_ref, b5_ref,
               o_ref):
    # x arrives as f32; cast to bf16 here (cheap VPU work hidden under MXU time)
    # instead of a separate wrapper-side XLA cast pass over HBM.
    h = x_ref[...].astype(jnp.bfloat16)

    for w_ref, b_ref in ((w1_ref, b1_ref), (w2_ref, b2_ref),
                         (w3_ref, b3_ref), (w4_ref, b4_ref)):
        z = jnp.dot(h, w_ref[...], preferred_element_type=jnp.float32) + b_ref[...]
        # Sigmoid via EUP ops: exp + approximate reciprocal (EUP slot is otherwise
        # idle); avoids the full-precision VALU divide in jax.nn.sigmoid.
        e = jnp.exp(-z)
        h = pl.reciprocal(1.0 + e, approx=True).astype(jnp.bfloat16)

    logits = jnp.dot(h, w5_ref[...], preferred_element_type=jnp.float32) + b5_ref[...]

    # Mask the padded class columns (10..127) so they contribute nothing.
    col = jax.lax.broadcasted_iota(jnp.int32, logits.shape, 1)
    logits = jnp.where(col < NUM_CLASSES, logits, -jnp.inf)

    # Numerically stable softmax over the (padded) class dim.
    m = jnp.max(logits, axis=-1, keepdims=True)
    e = jnp.exp(logits - m)
    denom = jnp.sum(e, axis=-1, keepdims=True)
    o_ref[...] = (e * pl.reciprocal(denom, approx=True)).astype(o_ref.dtype)


def prepare_params(params):
    """Zero-pad weights/biases to lane multiples; weights -> bf16, biases -> f32 (1, out).

    Padded weight ROWS must stay exactly zero: they multiply the sigmoid(0)=0.5
    values produced in the previous layer's padded columns.
    """
    flat = []
    for li, (w, b) in enumerate(params):
        in_p, out_p = PADDED_SIZES[li], PADDED_SIZES[li + 1]
        w_p = jnp.zeros((in_p, out_p), jnp.bfloat16)
        w_p = w_p.at[:w.shape[0], :w.shape[1]].set(w.astype(jnp.bfloat16))
        b_p = jnp.zeros((1, out_p), jnp.float32)
        b_p = b_p.at[:, :b.shape[1]].set(b.astype(jnp.float32))
        flat.extend((w_p, b_p))
    return flat


def _choose_tb(B, tb_max=1024):
    """Batch tile: multiple of 16 (bf16 sublane packing), capped at tb_max."""
    tb = min(tb_max, _round_up(B, 16))
    # If the whole batch would fit in a single tile but is big enough to split,
    # use (at least) two tiles so a 2-TensorCore chip (v7x) can run both halves
    # in parallel via the "parallel" batch axis.
    if B <= tb_max and B >= 64:
        tb = min(tb, _round_up(-(-B // 2), 16))
    return max(tb, 16)


def mlp_forward(x, params, tb_max=1024):
    """x: (B, 784) f32.  params: list of (W (in,out) f32, b (1,out) f32)."""
    B, F = x.shape
    assert F == LAYER_SIZES[0]
    flat_params = prepare_params(params)

    tb = _choose_tb(B, tb_max)
    b_pad = _round_up(B, tb)
    grid = (b_pad // tb,)

    # x stays f32 and UNPADDED. For the last grid step the (tb, F) block may
    # extend past row B: those rows read unspecified values, but every op in the
    # kernel is row-independent and the wrapper slices rows >= B off, so only the
    # explicitly row-padded output (b_pad rows) is ever written out of range of B.
    x_spec = pl.BlockSpec((tb, F), lambda i: (i, 0))
    out_spec = pl.BlockSpec((tb, OUT_PAD), lambda i: (i, 0))

    def _run(single_buffer_params):
        if single_buffer_params:
            # Constant index_map -> block never changes; single-buffer to save
            # ~0.6 MiB VMEM and skip useless per-step buffer bookkeeping.
            param_specs = [pl.BlockSpec(p.shape, lambda i: (0, 0),
                                        pipeline_mode=pl.Buffered(1))
                           for p in flat_params]
        else:
            param_specs = [pl.BlockSpec(p.shape, lambda i: (0, 0))
                           for p in flat_params]
        return pl.pallas_call(
            mlp_kernel,
            out_shape=jax.ShapeDtypeStruct((b_pad, OUT_PAD), jnp.float32),
            grid=grid,
            in_specs=[x_spec] + param_specs,
            out_specs=out_spec,
            compiler_params=pltpu.CompilerParams(
                dimension_semantics=("parallel",),
                vmem_limit_bytes=32 * 1024 * 1024),
        )(x, *flat_params)

    try:
        out_padded = _run(True)
    except Exception:
        # Fallback for jax versions without pipeline_mode support on
        # pallas_call BlockSpecs: default double-buffered weight blocks.
        out_padded = _run(False)

    return out_padded[:B, :NUM_CLASSES]


def init_params(key):
    """Deterministic init matching nn.Linear (PyTorch-style U(-k, k)); W stored as (in, out)."""
    params = []
    for fan_in, fan_out in zip(LAYER_SIZES[:-1], LAYER_SIZES[1:]):
        kw, kb, key = jax.random.split(key, 3)
        bound = 1.0 / (fan_in ** 0.5)
        w_oi = jax.random.uniform(kw, (fan_out, fan_in), jnp.float32, -bound, bound)
        b = jax.random.uniform(kb, (fan_out,), jnp.float32, -bound, bound)
        params.append((w_oi.T, b.reshape(1, fan_out)))
    return params


def reference_forward(x, params):
    """Pure-JAX reference with the same bf16-input / f32-accumulate dot semantics."""
    h = x
    for i, (w, b) in enumerate(params):
        h = jnp.dot(h.astype(jnp.bfloat16), w.astype(jnp.bfloat16),
                    preferred_element_type=jnp.float32) + b
        if i < len(params) - 1:
            h = jax.nn.sigmoid(h)
    return jax.nn.softmax(h, axis=1)


if __name__ == "__main__":
    key = jax.random.PRNGKey(0)
    kx, kp = jax.random.split(key)

    B = 8
    x = jax.random.normal(kx, (B, LAYER_SIZES[0]), jnp.float32)
    params = init_params(kp)

    out = mlp_forward(x, params)
    out = jax.block_until_ready(out)

    ref = reference_forward(x, params)
    assert out.shape == (B, LAYER_SIZES[-1])
    # approx reciprocal in the softmax denominator -> rows sum to 1 only to ~1e-3.
    assert jnp.allclose(jnp.sum(out, axis=1), 1.0, atol=5e-3)
    assert jnp.allclose(out, ref, atol=5e-3, rtol=1e-2)

    print("KERNEL_OK")
</pallas_src>

<mosaic_0001>
module attributes {stable_mosaic.version = 11 : i64} {
  func.func @mlp_kernel(%arg0: i32, %arg1: memref<16x784xf32, #tpu.memory_space<vmem>>, %arg2: memref<784x256xbf16, #tpu.memory_space<vmem>>, %arg3: memref<1x256xf32, #tpu.memory_space<vmem>>, %arg4: memref<256x128xbf16, #tpu.memory_space<vmem>>, %arg5: memref<1x128xf32, #tpu.memory_space<vmem>>, %arg6: memref<128x128xbf16, #tpu.memory_space<vmem>>, %arg7: memref<1x128xf32, #tpu.memory_space<vmem>>, %arg8: memref<128x128xbf16, #tpu.memory_space<vmem>>, %arg9: memref<1x128xf32, #tpu.memory_space<vmem>>, %arg10: memref<128x128xbf16, #tpu.memory_space<vmem>>, %arg11: memref<1x128xf32, #tpu.memory_space<vmem>>, %arg12: memref<16x128xf32, #tpu.memory_space<vmem>>) attributes {dimension_semantics = [#tpu.dimension_semantics<parallel>], iteration_bounds = array<i64: 1>, scalar_prefetch = 0 : i64, scratch_operands = 0 : i64, tpu.core_type = #tpu.core_type<tc>, window_params = [{transform_indices = @transform_0, window_bounds = array<i64: 16, 784>}, {pipeline_mode = #tpu.pipeline_mode<synchronous>, transform_indices = @transform_1, window_bounds = array<i64: 784, 256>}, {pipeline_mode = #tpu.pipeline_mode<synchronous>, transform_indices = @transform_2, window_bounds = array<i64: 1, 256>}, {pipeline_mode = #tpu.pipeline_mode<synchronous>, transform_indices = @transform_3, window_bounds = array<i64: 256, 128>}, {pipeline_mode = #tpu.pipeline_mode<synchronous>, transform_indices = @transform_4, window_bounds = array<i64: 1, 128>}, {pipeline_mode = #tpu.pipeline_mode<synchronous>, transform_indices = @transform_5, window_bounds = array<i64: 128, 128>}, {pipeline_mode = #tpu.pipeline_mode<synchronous>, transform_indices = @transform_6, window_bounds = array<i64: 1, 128>}, {pipeline_mode = #tpu.pipeline_mode<synchronous>, transform_indices = @transform_7, window_bounds = array<i64: 128, 128>}, {pipeline_mode = #tpu.pipeline_mode<synchronous>, transform_indices = @transform_8, window_bounds = array<i64: 1, 128>}, {pipeline_mode = #tpu.pipeline_mode<synchronous>, transform_indices = @transform_9, window_bounds = array<i64: 128, 128>}, {pipeline_mode = #tpu.pipeline_mode<synchronous>, transform_indices = @transform_10, window_bounds = array<i64: 1, 128>}, {transform_indices = @transform_11, window_bounds = array<i64: 16, 128>}]} {
    %c0 = arith.constant 0 : index
    %c0_0 = arith.constant 0 : index
    %0 = vector.load %arg1[%c0, %c0_0] : memref<16x784xf32, #tpu.memory_space<vmem>>, vector<16x784xf32>
    %1 = arith.truncf %0 : vector<16x784xf32> to vector<16x784xbf16>
    %c0_1 = arith.constant 0 : index
    %c0_2 = arith.constant 0 : index
    %2 = vector.load %arg2[%c0_1, %c0_2] : memref<784x256xbf16, #tpu.memory_space<vmem>>, vector<784x256xbf16>
    %cst = arith.constant dense<0.000000e+00> : vector<16x256xf32>
    %3 = tpu.matmul %1, %2, %cst {dimension_numbers = #tpu.dot_dimension_numbers<[1], [0], [0], [1], [0, 0, 1, 1], [], []>} : vector<16x784xbf16>, vector<784x256xbf16>, vector<16x256xf32> -> vector<16x256xf32>
    %c0_3 = arith.constant 0 : index
    %c0_4 = arith.constant 0 : index
    %4 = vector.load %arg3[%c0_3, %c0_4] : memref<1x256xf32, #tpu.memory_space<vmem>>, vector<1x256xf32>
    %5 = vector.broadcast %4 : vector<1x256xf32> to vector<16x256xf32>
    %6 = arith.addf %3, %5 : vector<16x256xf32>
    %cst_5 = arith.constant 0.000000e+00 : f32
    %7 = vector.broadcast %cst_5 : f32 to vector<16x256xf32>
    %8 = arith.subf %7, %6 : vector<16x256xf32>
    %9 = math.exp %8 : vector<16x256xf32>
    %cst_6 = arith.constant 1.000000e+00 : f32
    %10 = vector.broadcast %cst_6 : f32 to vector<16x256xf32>
    %11 = arith.addf %10, %9 : vector<16x256xf32>
    %12 = tpu.reciprocal %11 {approx = true} : vector<16x256xf32> -> vector<16x256xf32>
    %13 = arith.truncf %12 : vector<16x256xf32> to vector<16x256xbf16>
    %c0_7 = arith.constant 0 : index
    %c0_8 = arith.constant 0 : index
    %14 = vector.load %arg4[%c0_7, %c0_8] : memref<256x128xbf16, #tpu.memory_space<vmem>>, vector<256x128xbf16>
    %cst_9 = arith.constant dense<0.000000e+00> : vector<16x128xf32>
    %15 = tpu.matmul %13, %14, %cst_9 {dimension_numbers = #tpu.dot_dimension_numbers<[1], [0], [0], [1], [0, 0, 1, 1], [], []>} : vector<16x256xbf16>, vector<256x128xbf16>, vector<16x128xf32> -> vector<16x128xf32>
    %c0_10 = arith.constant 0 : index
    %c0_11 = arith.constant 0 : index
    %16 = vector.load %arg5[%c0_10, %c0_11] : memref<1x128xf32, #tpu.memory_space<vmem>>, vector<1x128xf32>
    %17 = vector.broadcast %16 : vector<1x128xf32> to vector<16x128xf32>
    %18 = arith.addf %15, %17 : vector<16x128xf32>
    %cst_12 = arith.constant 0.000000e+00 : f32
    %19 = vector.broadcast %cst_12 : f32 to vector<16x128xf32>
    %20 = arith.subf %19, %18 : vector<16x128xf32>
    %21 = math.exp %20 : vector<16x128xf32>
    %cst_13 = arith.constant 1.000000e+00 : f32
    %22 = vector.broadcast %cst_13 : f32 to vector<16x128xf32>
    %23 = arith.addf %22, %21 : vector<16x128xf32>
    %24 = tpu.reciprocal %23 {approx = true} : vector<16x128xf32> -> vector<16x128xf32>
    %25 = arith.truncf %24 : vector<16x128xf32> to vector<16x128xbf16>
    %c0_14 = arith.constant 0 : index
    %c0_15 = arith.constant 0 : index
    %26 = vector.load %arg6[%c0_14, %c0_15] : memref<128x128xbf16, #tpu.memory_space<vmem>>, vector<128x128xbf16>
    %cst_16 = arith.constant dense<0.000000e+00> : vector<16x128xf32>
    %27 = tpu.matmul %25, %26, %cst_16 {dimension_numbers = #tpu.dot_dimension_numbers<[1], [0], [0], [1], [0, 0, 1, 1], [], []>} : vector<16x128xbf16>, vector<128x128xbf16>, vector<16x128xf32> -> vector<16x128xf32>
    %c0_17 = arith.constant 0 : index
    %c0_18 = arith.constant 0 : index
    %28 = vector.load %arg7[%c0_17, %c0_18] : memref<1x128xf32, #tpu.memory_space<vmem>>, vector<1x128xf32>
    %29 = vector.broadcast %28 : vector<1x128xf32> to vector<16x128xf32>
    %30 = arith.addf %27, %29 : vector<16x128xf32>
    %cst_19 = arith.constant 0.000000e+00 : f32
    %31 = vector.broadcast %cst_19 : f32 to vector<16x128xf32>
    %32 = arith.subf %31, %30 : vector<16x128xf32>
    %33 = math.exp %32 : vector<16x128xf32>
    %cst_20 = arith.constant 1.000000e+00 : f32
    %34 = vector.broadcast %cst_20 : f32 to vector<16x128xf32>
    %35 = arith.addf %34, %33 : vector<16x128xf32>
    %36 = tpu.reciprocal %35 {approx = true} : vector<16x128xf32> -> vector<16x128xf32>
    %37 = arith.truncf %36 : vector<16x128xf32> to vector<16x128xbf16>
    %c0_21 = arith.constant 0 : index
    %c0_22 = arith.constant 0 : index
    %38 = vector.load %arg8[%c0_21, %c0_22] : memref<128x128xbf16, #tpu.memory_space<vmem>>, vector<128x128xbf16>
    %cst_23 = arith.constant dense<0.000000e+00> : vector<16x128xf32>
    %39 = tpu.matmul %37, %38, %cst_23 {dimension_numbers = #tpu.dot_dimension_numbers<[1], [0], [0], [1], [0, 0, 1, 1], [], []>} : vector<16x128xbf16>, vector<128x128xbf16>, vector<16x128xf32> -> vector<16x128xf32>
    %c0_24 = arith.constant 0 : index
    %c0_25 = arith.constant 0 : index
    %40 = vector.load %arg9[%c0_24, %c0_25] : memref<1x128xf32, #tpu.memory_space<vmem>>, vector<1x128xf32>
    %41 = vector.broadcast %40 : vector<1x128xf32> to vector<16x128xf32>
    %42 = arith.addf %39, %41 : vector<16x128xf32>
    %cst_26 = arith.constant 0.000000e+00 : f32
    %43 = vector.broadcast %cst_26 : f32 to vector<16x128xf32>
    %44 = arith.subf %43, %42 : vector<16x128xf32>
    %45 = math.exp %44 : vector<16x128xf32>
    %cst_27 = arith.constant 1.000000e+00 : f32
    %46 = vector.broadcast %cst_27 : f32 to vector<16x128xf32>
    %47 = arith.addf %46, %45 : vector<16x128xf32>
    %48 = tpu.reciprocal %47 {approx = true} : vector<16x128xf32> -> vector<16x128xf32>
    %49 = arith.truncf %48 : vector<16x128xf32> to vector<16x128xbf16>
    %c0_28 = arith.constant 0 : index
    %c0_29 = arith.constant 0 : index
    %50 = vector.load %arg10[%c0_28, %c0_29] : memref<128x128xbf16, #tpu.memory_space<vmem>>, vector<128x128xbf16>
    %cst_30 = arith.constant dense<0.000000e+00> : vector<16x128xf32>
    %51 = tpu.matmul %49, %50, %cst_30 {dimension_numbers = #tpu.dot_dimension_numbers<[1], [0], [0], [1], [0, 0, 1, 1], [], []>} : vector<16x128xbf16>, vector<128x128xbf16>, vector<16x128xf32> -> vector<16x128xf32>
    %c0_31 = arith.constant 0 : index
    %c0_32 = arith.constant 0 : index
    %52 = vector.load %arg11[%c0_31, %c0_32] : memref<1x128xf32, #tpu.memory_space<vmem>>, vector<1x128xf32>
    %53 = vector.broadcast %52 : vector<1x128xf32> to vector<16x128xf32>
    %54 = arith.addf %51, %53 : vector<16x128xf32>
    %55 = tpu.iota {dimensions = array<i32: 1>} : vector<16x128xi32>
    %c10_i32 = arith.constant 10 : i32
    %56 = vector.broadcast %c10_i32 : i32 to vector<16x128xi32>
    %57 = arith.cmpi slt, %55, %56 : vector<16x128xi32>
    %cst_33 = arith.constant 0xFF800000 : f32
    %58 = vector.broadcast %cst_33 : f32 to vector<16x128xf32>
    %59 = arith.select %57, %54, %58 : vector<16x128xi1>, vector<16x128xf32>
    %cst_34 = arith.constant dense<0xFF800000> : vector<16xf32>
    %60 = vector.multi_reduction <maximumf>, %59, %cst_34 [1] : vector<16x128xf32> to vector<16xf32>
    %61 = vector.shape_cast %60 : vector<16xf32> to vector<16x1xf32>
    %62 = vector.broadcast %61 : vector<16x1xf32> to vector<16x128xf32>
    %63 = arith.subf %59, %62 : vector<16x128xf32>
    %64 = math.exp %63 : vector<16x128xf32>
    %cst_35 = arith.constant dense<0.000000e+00> : vector<16xf32>
    %65 = vector.multi_reduction <add>, %64, %cst_35 [1] : vector<16x128xf32> to vector<16xf32>
    %66 = vector.shape_cast %65 : vector<16xf32> to vector<16x1xf32>
    %67 = tpu.reciprocal %66 {approx = true} : vector<16x1xf32> -> vector<16x1xf32>
    %68 = vector.broadcast %67 : vector<16x1xf32> to vector<16x128xf32>
    %69 = arith.mulf %64, %68 : vector<16x128xf32>
    %c0_36 = arith.constant 0 : index
    %c0_37 = arith.constant 0 : index
    %70 = vector.load %arg12[%c0_36, %c0_37] : memref<16x128xf32, #tpu.memory_space<vmem>>, vector<16x128xf32>
    tpu.vector_store %arg12[%c0_36, %c0_37], %69 {strides = array<i32>} : memref<16x128xf32, #tpu.memory_space<vmem>>, vector<16x128xf32>,
    return
  }
  func.func @transform_0(%arg0: i32) -> (i32, i32) {
    %c0_i32 = arith.constant 0 : i32
    %c0_i32_0 = arith.constant 0 : i32
    return %arg0, %c0_i32 : i32, i32
  }
  func.func @transform_1(%arg0: i32) -> (i32, i32) {
    %c0_i32 = arith.constant 0 : i32
    %c0_i32_0 = arith.constant 0 : i32
    %c0_i32_1 = arith.constant 0 : i32
    return %c0_i32, %c0_i32_0 : i32, i32
  }
  func.func @transform_2(%arg0: i32) -> (i32, i32) {
    %c0_i32 = arith.constant 0 : i32
    %c0_i32_0 = arith.constant 0 : i32
    %c0_i32_1 = arith.constant 0 : i32
    return %c0_i32, %c0_i32_0 : i32, i32
  }
  func.func @transform_3(%arg0: i32) -> (i32, i32) {
    %c0_i32 = arith.constant 0 : i32
    %c0_i32_0 = arith.constant 0 : i32
    %c0_i32_1 = arith.constant 0 : i32
    return %c0_i32, %c0_i32_0 : i32, i32
  }
  func.func @transform_4(%arg0: i32) -> (i32, i32) {
    %c0_i32 = arith.constant 0 : i32
    %c0_i32_0 = arith.constant 0 : i32
    %c0_i32_1 = arith.constant 0 : i32
    return %c0_i32, %c0_i32_0 : i32, i32
  }
  func.func @transform_5(%arg0: i32) -> (i32, i32) {
    %c0_i32 = arith.constant 0 : i32
    %c0_i32_0 = arith.constant 0 : i32
    %c0_i32_1 = arith.constant 0 : i32
    return %c0_i32, %c0_i32_0 : i32, i32
  }
  func.func @transform_6(%arg0: i32) -> (i32, i32) {
    %c0_i32 = arith.constant 0 : i32
    %c0_i32_0 = arith.constant 0 : i32
    %c0_i32_1 = arith.constant 0 : i32
    return %c0_i32, %c0_i32_0 : i32, i32
  }
  func.func @transform_7(%arg0: i32) -> (i32, i32) {
    %c0_i32 = arith.constant 0 : i32
    %c0_i32_0 = arith.constant 0 : i32
    %c0_i32_1 = arith.constant 0 : i32
    return %c0_i32, %c0_i32_0 : i32, i32
  }
  func.func @transform_8(%arg0: i32) -> (i32, i32) {
    %c0_i32 = arith.constant 0 : i32
    %c0_i32_0 = arith.constant 0 : i32
    %c0_i32_1 = arith.constant 0 : i32
    return %c0_i32, %c0_i32_0 : i32, i32
  }
  func.func @transform_9(%arg0: i32) -> (i32, i32) {
    %c0_i32 = arith.constant 0 : i32
    %c0_i32_0 = arith.constant 0 : i32
    %c0_i32_1 = arith.constant 0 : i32
    return %c0_i32, %c0_i32_0 : i32, i32
  }
  func.func @transform_10(%arg0: i32) -> (i32, i32) {
    %c0_i32 = arith.constant 0 : i32
    %c0_i32_0 = arith.constant 0 : i32
    %c0_i32_1 = arith.constant 0 : i32
    return %c0_i32, %c0_i32_0 : i32, i32
  }
  func.func @transform_11(%arg0: i32) -> (i32, i32) {
    %c0_i32 = arith.constant 0 : i32
    %c0_i32_0 = arith.constant 0 : i32
    return %arg0, %c0_i32 : i32, i32
  }
}

module attributes {stable_mosaic.version = 11 : i64} {
  func.func @mlp_kernel(%arg0: i32, %arg1: memref<16x784xf32, #tpu.memory_space<vmem>>, %arg2: memref<784x256xbf16, #tpu.memory_space<vmem>>, %arg3: memref<1x256xf32, #tpu.memory_space<vmem>>, %arg4: memref<256x128xbf16, #tpu.memory_space<vmem>>, %arg5: memref<1x128xf32, #tpu.memory_space<vmem>>, %arg6: memref<128x128xbf16, #tpu.memory_space<vmem>>, %arg7: memref<1x128xf32, #tpu.memory_space<vmem>>, %arg8: memref<128x128xbf16, #tpu.memory_space<vmem>>, %arg9: memref<1x128xf32, #tpu.memory_space<vmem>>, %arg10: memref<128x128xbf16, #tpu.memory_space<vmem>>, %arg11: memref<1x128xf32, #tpu.memory_space<vmem>>, %arg12: memref<16x128xf32, #tpu.memory_space<vmem>>) attributes {dimension_semantics = [#tpu.dimension_semantics<parallel>], iteration_bounds = array<i64: 1>, scalar_prefetch = 0 : i64, scratch_operands = 0 : i64, tpu.core_type = #tpu.core_type<tc>, window_params = [{transform_indices = @transform_0, window_bounds = array<i64: 16, 784>}, {pipeline_mode = #tpu.pipeline_mode<synchronous>, transform_indices = @transform_1, window_bounds = array<i64: 784, 256>}, {pipeline_mode = #tpu.pipeline_mode<synchronous>, transform_indices = @transform_2, window_bounds = array<i64: 1, 256>}, {pipeline_mode = #tpu.pipeline_mode<synchronous>, transform_indices = @transform_3, window_bounds = array<i64: 256, 128>}, {pipeline_mode = #tpu.pipeline_mode<synchronous>, transform_indices = @transform_4, window_bounds = array<i64: 1, 128>}, {pipeline_mode = #tpu.pipeline_mode<synchronous>, transform_indices = @transform_5, window_bounds = array<i64: 128, 128>}, {pipeline_mode = #tpu.pipeline_mode<synchronous>, transform_indices = @transform_6, window_bounds = array<i64: 1, 128>}, {pipeline_mode = #tpu.pipeline_mode<synchronous>, transform_indices = @transform_7, window_bounds = array<i64: 128, 128>}, {pipeline_mode = #tpu.pipeline_mode<synchronous>, transform_indices = @transform_8, window_bounds = array<i64: 1, 128>}, {pipeline_mode = #tpu.pipeline_mode<synchronous>, transform_indices = @transform_9, window_bounds = array<i64: 128, 128>}, {pipeline_mode = #tpu.pipeline_mode<synchronous>, transform_indices = @transform_10, window_bounds = array<i64: 1, 128>}, {transform_indices = @transform_11, window_bounds = array<i64: 16, 128>}]} {
    %c0 = arith.constant 0 : index
    %c0_0 = arith.constant 0 : index
    %0 = vector.load %arg1[%c0, %c0_0] : memref<16x784xf32, #tpu.memory_space<vmem>>, vector<16x784xf32>
    %1 = arith.truncf %0 : vector<16x784xf32> to vector<16x784xbf16>
    %c0_1 = arith.constant 0 : index
    %c0_2 = arith.constant 0 : index
    %2 = vector.load %arg2[%c0_1, %c0_2] : memref<784x256xbf16, #tpu.memory_space<vmem>>, vector<784x256xbf16>
    %cst = arith.constant dense<0.000000e+00> : vector<16x256xf32>
    %3 = tpu.matmul %1, %2, %cst {dimension_numbers = #tpu.dot_dimension_numbers<[1], [0], [0], [1], [0, 0, 1, 1], [], []>} : vector<16x784xbf16>, vector<784x256xbf16>, vector<16x256xf32> -> vector<16x256xf32>
    %c0_3 = arith.constant 0 : index
    %c0_4 = arith.constant 0 : index
    %4 = vector.load %arg3[%c0_3, %c0_4] : memref<1x256xf32, #tpu.memory_space<vmem>>, vector<1x256xf32>
    %5 = vector.broadcast %4 : vector<1x256xf32> to vector<16x256xf32>
    %6 = arith.addf %3, %5 : vector<16x256xf32>
    %cst_5 = arith.constant 0.000000e+00 : f32
    %7 = vector.broadcast %cst_5 : f32 to vector<16x256xf32>
    %8 = arith.subf %7, %6 : vector<16x256xf32>
    %9 = math.exp %8 : vector<16x256xf32>
    %cst_6 = arith.constant 1.000000e+00 : f32
    %10 = vector.broadcast %cst_6 : f32 to vector<16x256xf32>
    %11 = arith.addf %10, %9 : vector<16x256xf32>
    %12 = tpu.reciprocal %11 {approx = true} : vector<16x256xf32> -> vector<16x256xf32>
    %13 = arith.truncf %12 : vector<16x256xf32> to vector<16x256xbf16>
    %c0_7 = arith.constant 0 : index
    %c0_8 = arith.constant 0 : index
    %14 = vector.load %arg4[%c0_7, %c0_8] : memref<256x128xbf16, #tpu.memory_space<vmem>>, vector<256x128xbf16>
    %cst_9 = arith.constant dense<0.000000e+00> : vector<16x128xf32>
    %15 = tpu.matmul %13, %14, %cst_9 {dimension_numbers = #tpu.dot_dimension_numbers<[1], [0], [0], [1], [0, 0, 1, 1], [], []>} : vector<16x256xbf16>, vector<256x128xbf16>, vector<16x128xf32> -> vector<16x128xf32>
    %c0_10 = arith.constant 0 : index
    %c0_11 = arith.constant 0 : index
    %16 = vector.load %arg5[%c0_10, %c0_11] : memref<1x128xf32, #tpu.memory_space<vmem>>, vector<1x128xf32>
    %17 = vector.broadcast %16 : vector<1x128xf32> to vector<16x128xf32>
    %18 = arith.addf %15, %17 : vector<16x128xf32>
    %cst_12 = arith.constant 0.000000e+00 : f32
    %19 = vector.broadcast %cst_12 : f32 to vector<16x128xf32>
    %20 = arith.subf %19, %18 : vector<16x128xf32>
    %21 = math.exp %20 : vector<16x128xf32>
    %cst_13 = arith.constant 1.000000e+00 : f32
    %22 = vector.broadcast %cst_13 : f32 to vector<16x128xf32>
    %23 = arith.addf %22, %21 : vector<16x128xf32>
    %24 = tpu.reciprocal %23 {approx = true} : vector<16x128xf32> -> vector<16x128xf32>
    %25 = arith.truncf %24 : vector<16x128xf32> to vector<16x128xbf16>
    %c0_14 = arith.constant 0 : index
    %c0_15 = arith.constant 0 : index
    %26 = vector.load %arg6[%c0_14, %c0_15] : memref<128x128xbf16, #tpu.memory_space<vmem>>, vector<128x128xbf16>
    %cst_16 = arith.constant dense<0.000000e+00> : vector<16x128xf32>
    %27 = tpu.matmul %25, %26, %cst_16 {dimension_numbers = #tpu.dot_dimension_numbers<[1], [0], [0], [1], [0, 0, 1, 1], [], []>} : vector<16x128xbf16>, vector<128x128xbf16>, vector<16x128xf32> -> vector<16x128xf32>
    %c0_17 = arith.constant 0 : index
    %c0_18 = arith.constant 0 : index
    %28 = vector.load %arg7[%c0_17, %c0_18] : memref<1x128xf32, #tpu.memory_space<vmem>>, vector<1x128xf32>
    %29 = vector.broadcast %28 : vector<1x128xf32> to vector<16x128xf32>
    %30 = arith.addf %27, %29 : vector<16x128xf32>
    %cst_19 = arith.constant 0.000000e+00 : f32
    %31 = vector.broadcast %cst_19 : f32 to vector<16x128xf32>
    %32 = arith.subf %31, %30 : vector<16x128xf32>
    %33 = math.exp %32 : vector<16x128xf32>
    %cst_20 = arith.constant 1.000000e+00 : f32
    %34 = vector.broadcast %cst_20 : f32 to vector<16x128xf32>
    %35 = arith.addf %34, %33 : vector<16x128xf32>
    %36 = tpu.reciprocal %35 {approx = true} : vector<16x128xf32> -> vector<16x128xf32>
    %37 = arith.truncf %36 : vector<16x128xf32> to vector<16x128xbf16>
    %c0_21 = arith.constant 0 : index
    %c0_22 = arith.constant 0 : index
    %38 = vector.load %arg8[%c0_21, %c0_22] : memref<128x128xbf16, #tpu.memory_space<vmem>>, vector<128x128xbf16>
    %cst_23 = arith.constant dense<0.000000e+00> : vector<16x128xf32>
    %39 = tpu.matmul %37, %38, %cst_23 {dimension_numbers = #tpu.dot_dimension_numbers<[1], [0], [0], [1], [0, 0, 1, 1], [], []>} : vector<16x128xbf16>, vector<128x128xbf16>, vector<16x128xf32> -> vector<16x128xf32>
    %c0_24 = arith.constant 0 : index
    %c0_25 = arith.constant 0 : index
    %40 = vector.load %arg9[%c0_24, %c0_25] : memref<1x128xf32, #tpu.memory_space<vmem>>, vector<1x128xf32>
    %41 = vector.broadcast %40 : vector<1x128xf32> to vector<16x128xf32>
    %42 = arith.addf %39, %41 : vector<16x128xf32>
    %cst_26 = arith.constant 0.000000e+00 : f32
    %43 = vector.broadcast %cst_26 : f32 to vector<16x128xf32>
    %44 = arith.subf %43, %42 : vector<16x128xf32>
    %45 = math.exp %44 : vector<16x128xf32>
    %cst_27 = arith.constant 1.000000e+00 : f32
    %46 = vector.broadcast %cst_27 : f32 to vector<16x128xf32>
    %47 = arith.addf %46, %45 : vector<16x128xf32>
    %48 = tpu.reciprocal %47 {approx = true} : vector<16x128xf32> -> vector<16x128xf32>
    %49 = arith.truncf %48 : vector<16x128xf32> to vector<16x128xbf16>
    %c0_28 = arith.constant 0 : index
    %c0_29 = arith.constant 0 : index
    %50 = vector.load %arg10[%c0_28, %c0_29] : memref<128x128xbf16, #tpu.memory_space<vmem>>, vector<128x128xbf16>
    %cst_30 = arith.constant dense<0.000000e+00> : vector<16x128xf32>
    %51 = tpu.matmul %49, %50, %cst_30 {dimension_numbers = #tpu.dot_dimension_numbers<[1], [0], [0], [1], [0, 0, 1, 1], [], []>} : vector<16x128xbf16>, vector<128x128xbf16>, vector<16x128xf32> -> vector<16x128xf32>
    %c0_31 = arith.constant 0 : index
    %c0_32 = arith.constant 0 : index
    %52 = vector.load %arg11[%c0_31, %c0_32] : memref<1x128xf32, #tpu.memory_space<vmem>>, vector<1x128xf32>
    %53 = vector.broadcast %52 : vector<1x128xf32> to vector<16x128xf32>
    %54 = arith.addf %51, %53 : vector<16x128xf32>
    %55 = tpu.iota {dimensions = array<i32: 1>} : vector<16x128xi32>
    %c10_i32 = arith.constant 10 : i32
    %56 = vector.broadcast %c10_i32 : i32 to vector<16x128xi32>
    %57 = arith.cmpi slt, %55, %56 : vector<16x128xi32>
    %cst_33 = arith.constant 0xFF800000 : f32
    %58 = vector.broadcast %cst_33 : f32 to vector<16x128xf32>
    %59 = arith.select %57, %54, %58 : vector<16x128xi1>, vector<16x128xf32>
    %cst_34 = arith.constant dense<0xFF800000> : vector<16xf32>
    %60 = vector.multi_reduction <maximumf>, %59, %cst_34 [1] : vector<16x128xf32> to vector<16xf32>
    %61 = vector.shape_cast %60 : vector<16xf32> to vector<16x1xf32>
    %62 = vector.broadcast %61 : vector<16x1xf32> to vector<16x128xf32>
    %63 = arith.subf %59, %62 : vector<16x128xf32>
    %64 = math.exp %63 : vector<16x128xf32>
    %cst_35 = arith.constant dense<0.000000e+00> : vector<16xf32>
    %65 = vector.multi_reduction <add>, %64, %cst_35 [1] : vector<16x128xf32> to vector<16xf32>
    %66 = vector.shape_cast %65 : vector<16xf32> to vector<16x1xf32>
    %67 = tpu.reciprocal %66 {approx = true} : vector<16x1xf32> -> vector<16x1xf32>
    %68 = vector.broadcast %67 : vector<16x1xf32> to vector<16x128xf32>
    %69 = arith.mulf %64, %68 : vector<16x128xf32>
    %c0_36 = arith.constant 0 : index
    %c0_37 = arith.constant 0 : index
    %70 = vector.load %arg12[%c0_36, %c0_37] : memref<16x128xf32, #tpu.memory_space<vmem>>, vector<16x128xf32>
    tpu.vector_store %arg12[%c0_36, %c0_37], %69 {strides = array<i32>} : memref<16x128xf32, #tpu.memory_space<vmem>>, vector<16x128xf32>,
    return
  }
  func.func @transform_0(%arg0: i32) -> (i32, i32) {
    %c0_i32 = arith.constant 0 : i32
    %c0_i32_0 = arith.constant 0 : i32
    return %arg0, %c0_i32 : i32, i32
  }
  func.func @transform_1(%arg0: i32) -> (i32, i32) {
    %c0_i32 = arith.constant 0 : i32
    %c0_i32_0 = arith.constant 0 : i32
    %c0_i32_1 = arith.constant 0 : i32
    return %c0_i32, %c0_i32_0 : i32, i32
  }
  func.func @transform_2(%arg0: i32) -> (i32, i32) {
    %c0_i32 = arith.constant 0 : i32
    %c0_i32_0 = arith.constant 0 : i32
    %c0_i32_1 = arith.constant 0 : i32
    return %c0_i32, %c0_i32_0 : i32, i32
  }
  func.func @transform_3(%arg0: i32) -> (i32, i32) {
    %c0_i32 = arith.constant 0 : i32
    %c0_i32_0 = arith.constant 0 : i32
    %c0_i32_1 = arith.constant 0 : i32
    return %c0_i32, %c0_i32_0 : i32, i32
  }
  func.func @transform_4(%arg0: i32) -> (i32, i32) {
    %c0_i32 = arith.constant 0 : i32
    %c0_i32_0 = arith.constant 0 : i32
    %c0_i32_1 = arith.constant 0 : i32
    return %c0_i32, %c0_i32_0 : i32, i32
  }
  func.func @transform_5(%arg0: i32) -> (i32, i32) {
    %c0_i32 = arith.constant 0 : i32
    %c0_i32_0 = arith.constant 0 : i32
    %c0_i32_1 = arith.constant 0 : i32
    return %c0_i32, %c0_i32_0 : i32, i32
  }
  func.func @transform_6(%arg0: i32) -> (i32, i32) {
    %c0_i32 = arith.constant 0 : i32
    %c0_i32_0 = arith.constant 0 : i32
    %c0_i32_1 = arith.constant 0 : i32
    return %c0_i32, %c0_i32_0 : i32, i32
  }
  func.func @transform_7(%arg0: i32) -> (i32, i32) {
    %c0_i32 = arith.constant 0 : i32
    %c0_i32_0 = arith.constant 0 : i32
    %c0_i32_1 = arith.constant 0 : i32
    return %c0_i32, %c0_i32_0 : i32, i32
  }
  func.func @transform_8(%arg0: i32) -> (i32, i32) {
    %c0_i32 = arith.constant 0 : i32
    %c0_i32_0 = arith.constant 0 : i32
    %c0_i32_1 = arith.constant 0 : i32
    return %c0_i32, %c0_i32_0 : i32, i32
  }
  func.func @transform_9(%arg0: i32) -> (i32, i32) {
    %c0_i32 = arith.constant 0 : i32
    %c0_i32_0 = arith.constant 0 : i32
    %c0_i32_1 = arith.constant 0 : i32
    return %c0_i32, %c0_i32_0 : i32, i32
  }
  func.func @transform_10(%arg0: i32) -> (i32, i32) {
    %c0_i32 = arith.constant 0 : i32
    %c0_i32_0 = arith.constant 0 : i32
    %c0_i32_1 = arith.constant 0 : i32
    return %c0_i32, %c0_i32_0 : i32, i32
  }
  func.func @transform_11(%arg0: i32) -> (i32, i32) {
    %c0_i32 = arith.constant 0 : i32
    %c0_i32_0 = arith.constant 0 : i32
    return %arg0, %c0_i32 : i32, i32
  }
}

</mosaic_0001>

<llo_original>
// kernel: tpu_custom_call.1
$region0: #{tpu_custom_call.1}
  #allocation0 [shape = 'u32[]', space=smem, size = 0x4, offset = 0x4, fixed_abs, tag = 'smem constant byte address 0x4 - core index']
  #allocation1 [shape = 'u32[144,128]{1,0:T(1,128)}', space=vmem, size = 0x12000, scoped, tag = 'internal scratch']
  %s0 = inlined_call_operand.hbm [shape: f32[8,784], index: 0, kind: input, shape index: {}]
  %s1 = inlined_call_operand.hbm [shape: bf16[784,256], index: 1, kind: input, shape index: {}]
  %s2 = inlined_call_operand.vmem [shape: f32[1,256], index: 2, kind: input, shape index: {}]
  %s3 = inlined_call_operand.hbm [shape: bf16[256,128], index: 3, kind: input, shape index: {}]
  %s4 = inlined_call_operand.vmem [shape: f32[1,128], index: 4, kind: input, shape index: {}]
  %s5 = inlined_call_operand.hbm [shape: bf16[128,128], index: 5, kind: input, shape index: {}]
  %s6 = inlined_call_operand.vmem [shape: f32[1,128], index: 6, kind: input, shape index: {}]
  %s7 = inlined_call_operand.hbm [shape: bf16[128,128], index: 7, kind: input, shape index: {}]
  %s8 = inlined_call_operand.vmem [shape: f32[1,128], index: 8, kind: input, shape index: {}]
  %s9 = inlined_call_operand.hbm [shape: bf16[128,128], index: 9, kind: input, shape index: {}]
  %s10 = inlined_call_operand.vmem [shape: f32[1,128], index: 10, kind: input, shape index: {}]
  %s11 = inlined_call_operand.hbm [shape: f32[16,128], index: 11, kind: output, shape index: {}]
  %s12 = sld [smem:[#allocation0]]
  $region78: #{tpu_custom_call.1} parent=0
    _
  %s14 = ssub.s32 1, %s12
  %s15 = scalar_select 0, %s14, %s12
  $region1: #{tpu_custom_call.1} parent=0
    #allocation2 [shape = 'u8[57344]{0}', space=vmem, size = 0xe000, scoped, tag = 'input window, operand 0, single buffered']
    #allocation3 [shape = 's32[1]{0}', space=sflag, size = 0x4, scoped, tag = 'scoped memory for tpu_custom_call.1']
    #allocation4 [shape = 's32[1]{0}', space=sflag, size = 0x4, scoped, tag = 'scoped memory for tpu_custom_call.1']
    #allocation5 [shape = 'u8[401408]{0}', space=vmem, size = 0x62000, scoped, tag = 'input window, operand 1, single buffered']
    #allocation6 [shape = 's32[1]{0}', space=sflag, size = 0x4, scoped, tag = 'scoped memory for tpu_custom_call.1']
    #allocation7 [shape = 'u8[65536]{0}', space=vmem, size = 0x10000, scoped, tag = 'input window, operand 3, single buffered']
    #allocation8 [shape = 'u8[32768]{0}', space=vmem, size = 0x8000, scoped, tag = 'input window, operand 5, single buffered']
    #allocation9 [shape = 's32[1]{0}', space=sflag, size = 0x4, scoped, tag = 'scoped memory for tpu_custom_call.1']
    #allocation10 [shape = 'u8[32768]{0}', space=vmem, size = 0x8000, scoped, tag = 'input window, operand 7, single buffered']
    #allocation11 [shape = 'u8[32768]{0}', space=vmem, size = 0x8000, scoped, tag = 'input window, operand 9, single buffered']
    #allocation12 [shape = 's32[1]{0}', space=sflag, size = 0x4, scoped, tag = 'scoped memory for tpu_custom_call.1']
    #allocation13 [shape = 'u8[8192]{0}', space=vmem, size = 0x2000, scoped, tag = 'output window, operand 0, single buffered']
    %16 = vsyncpa [#allocation3], 0
    %17 = vsyncpa [#allocation6], 0
    %18 = vsyncpa [#allocation9], 0
    %19 = vsyncpa [#allocation12], 0
    %20 = vsyncpa [#allocation4], 0
    // Predicated region
    $region2: #{tpu_custom_call.1} parent=1 // pred_check
      _
    $region3: #{tpu_custom_call.1} parent=1 // pred_check_branch
      %22 = sbr.rel (0) target = $region5
    $region4: #{tpu_custom_call.1} parent=1 // pred_region
      %s24 = ssub.s32 1792, 896
      %25 = vsyncadd [#allocation3], %s24
      %s26 = sshll.u32 [#allocation2], 4
      %s27 = int_to_ptr.vmem [resolvable:$true] %s26
      %32 = dma.hbm_to_vmem [thread:$0]  %s0, 896, %s27, [#allocation3], 896, 896, 56
    $region5: #{tpu_custom_call.1} parent=1 // pred_fallthru
      _
    // Predicated region
    $region6: #{tpu_custom_call.1} parent=1 // pred_check
      _
    $region7: #{tpu_custom_call.1} parent=1 // pred_check_branch
      %34 = sbr.rel (0) target = $region9
    $region8: #{tpu_custom_call.1} parent=1 // pred_region
      %s36 = ssub.s32 12544, 12544
      %37 = vsyncadd [#allocation6], %s36
      %s38 = sshll.u32 [#allocation5], 4
      %s39 = int_to_ptr.vmem [resolvable:$true] %s38
      %44 = dma.hbm_to_vmem [thread:$0]  %s1, 12544, %s39, [#allocation6], 128, 128, 8
    $region9: #{tpu_custom_call.1} parent=1 // pred_fallthru
      _
    // Predicated region
    $region10: #{tpu_custom_call.1} parent=1 // pred_check
      _
    $region11: #{tpu_custom_call.1} parent=1 // pred_check_branch
      %46 = sbr.rel (0) target = $region13
    $region12: #{tpu_custom_call.1} parent=1 // pred_region
      _
    $region13: #{tpu_custom_call.1} parent=1 // pred_fallthru
      _
    // Predicated region
    $region14: #{tpu_custom_call.1} parent=1 // pred_check
      _
    $region15: #{tpu_custom_call.1} parent=1 // pred_check_branch
      %48 = sbr.rel (0) target = $region17
    $region16: #{tpu_custom_call.1} parent=1 // pred_region
      %s50 = ssub.s32 2048, 2048
      %51 = vsyncadd [#allocation6], %s50
      %s52 = sshll.u32 [#allocation7], 4
      %s53 = int_to_ptr.vmem [resolvable:$true] %s52
      %58 = dma.hbm_to_vmem [thread:$0]  %s3, 2048, %s53, [#allocation6], 64, 64, 4
    $region17: #{tpu_custom_call.1} parent=1 // pred_fallthru
      _
    // Predicated region
    $region18: #{tpu_custom_call.1} parent=1 // pred_check
      _
    $region19: #{tpu_custom_call.1} parent=1 // pred_check_branch
      %60 = sbr.rel (0) target = $region21
    $region20: #{tpu_custom_call.1} parent=1 // pred_region
      _
    $region21: #{tpu_custom_call.1} parent=1 // pred_fallthru
      _
    // Predicated region
    $region22: #{tpu_custom_call.1} parent=1 // pred_check
      _
    $region23: #{tpu_custom_call.1} parent=1 // pred_check_branch
      %62 = sbr.rel (0) target = $region25
    $region24: #{tpu_custom_call.1} parent=1 // pred_region
      %s64 = ssub.s32 1024, 1024
      %65 = vsyncadd [#allocation9], %s64
      %s66 = sshll.u32 [#allocation8], 4
      %s67 = int_to_ptr.vmem [resolvable:$true] %s66
      %72 = dma.hbm_to_vmem [thread:$0]  %s5, 1024, %s67, [#allocation9], 64, 64, 4
    $region25: #{tpu_custom_call.1} parent=1 // pred_fallthru
      _
    // Predicated region
    $region26: #{tpu_custom_call.1} parent=1 // pred_check
      _
    $region27: #{tpu_custom_call.1} parent=1 // pred_check_branch
      %74 = sbr.rel (0) target = $region29
    $region28: #{tpu_custom_call.1} parent=1 // pred_region
      _
    $region29: #{tpu_custom_call.1} parent=1 // pred_fallthru
      _
    // Predicated region
    $region30: #{tpu_custom_call.1} parent=1 // pred_check
      _
    $region31: #{tpu_custom_call.1} parent=1 // pred_check_branch
      %76 = sbr.rel (0) target = $region33
    $region32: #{tpu_custom_call.1} parent=1 // pred_region
      %s78 = ssub.s32 1024, 1024
      %79 = vsyncadd [#allocation9], %s78
      %s80 = sshll.u32 [#allocation10], 4
      %s81 = int_to_ptr.vmem [resolvable:$true] %s80
      %86 = dma.hbm_to_vmem [thread:$0]  %s7, 1024, %s81, [#allocation9], 64, 64, 4
    $region33: #{tpu_custom_call.1} parent=1 // pred_fallthru
      _
    // Predicated region
    $region34: #{tpu_custom_call.1} parent=1 // pred_check
      _
    $region35: #{tpu_custom_call.1} parent=1 // pred_check_branch
      %88 = sbr.rel (0) target = $region37
    $region36: #{tpu_custom_call.1} parent=1 // pred_region
      _
    $region37: #{tpu_custom_call.1} parent=1 // pred_fallthru
      _
    // Predicated region
    $region38: #{tpu_custom_call.1} parent=1 // pred_check
      _
    $region39: #{tpu_custom_call.1} parent=1 // pred_check_branch
      %90 = sbr.rel (0) target = $region41
    $region40: #{tpu_custom_call.1} parent=1 // pred_region
      %s92 = ssub.s32 1024, 1024
      %93 = vsyncadd [#allocation12], %s92
      %s94 = sshll.u32 [#allocation11], 4
      %s95 = int_to_ptr.vmem [resolvable:$true] %s94
      %100 = dma.hbm_to_vmem [thread:$0]  %s9, 1024, %s95, [#allocation12], 64, 64, 4
    $region41: #{tpu_custom_call.1} parent=1 // pred_fallthru
      _
    // Predicated region
    $region42: #{tpu_custom_call.1} parent=1 // pred_check
      _
    $region43: #{tpu_custom_call.1} parent=1 // pred_check_branch
      %102 = sbr.rel (0) target = $region45
    $region44: #{tpu_custom_call.1} parent=1 // pred_region
      _
    $region45: #{tpu_custom_call.1} parent=1 // pred_fallthru
      _
    // Predicated region
    $region46: #{tpu_custom_call.1} parent=1 // pred_check
      _
    $region47: #{tpu_custom_call.1} parent=1 // pred_check_branch
      %104 = sbr.rel (0) target = $region49
    $region48: #{tpu_custom_call.1} parent=1 // pred_region
      %105 = dma.done [#allocation3], 1792
    $region49: #{tpu_custom_call.1} parent=1 // pred_fallthru
      _
    // Predicated region
    $region50: #{tpu_custom_call.1} parent=1 // pred_check
      _
    $region51: #{tpu_custom_call.1} parent=1 // pred_check_branch
      %107 = sbr.rel (0) target = $region53
    $region52: #{tpu_custom_call.1} parent=1 // pred_region
      %108 = dma.done [#allocation6], 12544
    $region53: #{tpu_custom_call.1} parent=1 // pred_fallthru
      _
    // Predicated region
    $region54: #{tpu_custom_call.1} parent=1 // pred_check
      _
    $region55: #{tpu_custom_call.1} parent=1 // pred_check_branch
      %110 = sbr.rel (0) target = $region57
    $region56: #{tpu_custom_call.1} parent=1 // pred_region
      %111 = dma.done [#allocation6], 2048
    $region57: #{tpu_custom_call.1} parent=1 // pred_fallthru
      _
    // Predicated region
    $region58: #{tpu_custom_call.1} parent=1 // pred_check
      _
    $region59: #{tpu_custom_call.1} parent=1 // pred_check_branch
      %113 = sbr.rel (0) target = $region61
    $region60: #{tpu_custom_call.1} parent=1 // pred_region
      %114 = dma.done [#allocation9], 1024
    $region61: #{tpu_custom_call.1} parent=1 // pred_fallthru
      _
    // Predicated region
    $region62: #{tpu_custom_call.1} parent=1 // pred_check
      _
    $region63: #{tpu_custom_call.1} parent=1 // pred_check_branch
      %116 = sbr.rel (0) target = $region65
    $region64: #{tpu_custom_call.1} parent=1 // pred_region
      %117 = dma.done [#allocation9], 1024
    $region65: #{tpu_custom_call.1} parent=1 // pred_fallthru
      _
    // Predicated region
    $region66: #{tpu_custom_call.1} parent=1 // pred_check
      _
    $region67: #{tpu_custom_call.1} parent=1 // pred_check_branch
      %119 = sbr.rel (0) target = $region69
    $region68: #{tpu_custom_call.1} parent=1 // pred_region
      %120 = dma.done [#allocation12], 1024
    $region69: #{tpu_custom_call.1} parent=1 // pred_fallthru
      _
    %v122 = vld [vmem:[#allocation2] sm:$0xff]
    %v123 = vld [vmem:[#allocation2 + $0x8] sm:$0xff]
    %v124 = vld [vmem:[#allocation2 + $0x10] sm:$0xff]
    %v125 = vld [vmem:[#allocation2 + $0x18] sm:$0xff]
    %v126 = vld [vmem:[#allocation2 + $0x20] sm:$0xff]
    %v127 = vld [vmem:[#allocation2 + $0x28] sm:$0xff]
    %v128 = vld [vmem:[#allocation2 + $0x30] sm:$0xff]
    %v129 = vld [vmem:[#allocation2 + $0x38] sm:$0xff]
    %v130 = vld [vmem:[#allocation2 + $0x40] sm:$0xff]
    %v131 = vld [vmem:[#allocation2 + $0x48] sm:$0xff]
    %v132 = vld [vmem:[#allocation2 + $0x50] sm:$0xff]
    %v133 = vld [vmem:[#allocation2 + $0x58] sm:$0xff]
    %v134 = vld [vmem:[#allocation2 + $0x60] sm:$0xff]
    %v135 = vld [vmem:[#allocation2 + $0x68] sm:$0xff]
    %v136 = vpack.c.bf16 %v129, %v122
    %v137 = vpack.c.bf16 %v130, %v123
    %v138 = vpack.c.bf16 %v131, %v124
    %v139 = vpack.c.bf16 %v132, %v125
    %v140 = vpack.c.bf16 %v133, %v126
    %v141 = vpack.c.bf16 %v134, %v127
    %v142 = vpack.c.bf16 %v135, %v128
    %v143 = vld [vmem:[#allocation5] sm:$0xff]
    %v144 = vld [vmem:[#allocation5 + $0x8] sm:$0xff]
    %v145 = vld [vmem:[#allocation5 + $0x10] sm:$0xff]
    %v146 = vld [vmem:[#allocation5 + $0x18] sm:$0xff]
    %v147 = vld [vmem:[#allocation5 + $0x20] sm:$0xff]
    %v148 = vld [vmem:[#allocation5 + $0x28] sm:$0xff]
    %v149 = vld [vmem:[#allocation5 + $0x30] sm:$0xff]
    %v150 = vld [vmem:[#allocation5 + $0x38] sm:$0xff]
    %v151 = vld [vmem:[#allocation5 + $0x40] sm:$0xff]
    %v152 = vld [vmem:[#allocation5 + $0x48] sm:$0xff]
    %v153 = vld [vmem:[#allocation5 + $0x50] sm:$0xff]
    %v154 = vld [vmem:[#allocation5 + $0x58] sm:$0xff]
    %v155 = vld [vmem:[#allocation5 + $0x60] sm:$0xff]
    %v156 = vld [vmem:[#allocation5 + $0x68] sm:$0xff]
    %v157 = vld [vmem:[#allocation5 + $0x70] sm:$0xff]
    %v158 = vld [vmem:[#allocation5 + $0x78] sm:$0xff]
    %v159 = vld [vmem:[#allocation5 + $0x80] sm:$0xff]
    %v160 = vld [vmem:[#allocation5 + $0x88] sm:$0xff]
    %v161 = vld [vmem:[#allocation5 + $0x90] sm:$0xff]
    %v162 = vld [vmem:[#allocation5 + $0x98] sm:$0xff]
    %v163 = vld [vmem:[#allocation5 + $0xa0] sm:$0xff]
    %v164 = vld [vmem:[#allocation5 + $0xa8] sm:$0xff]
    %v165 = vld [vmem:[#allocation5 + $0xb0] sm:$0xff]
    %v166 = vld [vmem:[#allocation5 + $0xb8] sm:$0xff]
    %v167 = vld [vmem:[#allocation5 + $0xc0] sm:$0xff]
    %v168 = vld [vmem:[#allocation5 + $0xc8] sm:$0xff]
    %v169 = vld [vmem:[#allocation5 + $0xd0] sm:$0xff]
    %v170 = vld [vmem:[#allocation5 + $0xd8] sm:$0xff]
    %v171 = vld [vmem:[#allocation5 + $0xe0] sm:$0xff]
    %v172 = vld [vmem:[#allocation5 + $0xe8] sm:$0xff]
    %v173 = vld [vmem:[#allocation5 + $0xf0] sm:$0xff]
    %v174 = vld [vmem:[#allocation5 + $0xf8] sm:$0xff]
    %v175 = vld [vmem:[#allocation5 + $0x100] sm:$0xff]
    %v176 = vld [vmem:[#allocation5 + $0x108] sm:$0xff]
    %v177 = vld [vmem:[#allocation5 + $0x110] sm:$0xff]
    %v178 = vld [vmem:[#allocation5 + $0x118] sm:$0xff]
    %v179 = vld [vmem:[#allocation5 + $0x120] sm:$0xff]
    %v180 = vld [vmem:[#allocation5 + $0x128] sm:$0xff]
    %v181 = vld [vmem:[#allocation5 + $0x130] sm:$0xff]
    %v182 = vld [vmem:[#allocation5 + $0x138] sm:$0xff]
    %v183 = vld [vmem:[#allocation5 + $0x140] sm:$0xff]
    %v184 = vld [vmem:[#allocation5 + $0x148] sm:$0xff]
    %v185 = vld [vmem:[#allocation5 + $0x150] sm:$0xff]
    %v186 = vld [vmem:[#allocation5 + $0x158] sm:$0xff]
    %v187 = vld [vmem:[#allocation5 + $0x160] sm:$0xff]
    %v188 = vld [vmem:[#allocation5 + $0x168] sm:$0xff]
    %v189 = vld [vmem:[#allocation5 + $0x170] sm:$0xff]
    %v190 = vld [vmem:[#allocation5 + $0x178] sm:$0xff]
    %v191 = vld [vmem:[#allocation5 + $0x180] sm:$0xff]
    %v192 = vld [vmem:[#allocation5 + $0x188] sm:$0xff]
    %v193 = vld [vmem:[#allocation5 + $0x190] sm:$0xff]
    %v194 = vld [vmem:[#allocation5 + $0x198] sm:$0xff]
    %v195 = vld [vmem:[#allocation5 + $0x1a0] sm:$0xff]
    %v196 = vld [vmem:[#allocation5 + $0x1a8] sm:$0xff]
    %v197 = vld [vmem:[#allocation5 + $0x1b0] sm:$0xff]
    %v198 = vld [vmem:[#allocation5 + $0x1b8] sm:$0xff]
    %v199 = vld [vmem:[#allocation5 + $0x1c0] sm:$0xff]
    %v200 = vld [vmem:[#allocation5 + $0x1c8] sm:$0xff]
    %v201 = vld [vmem:[#allocation5 + $0x1d0] sm:$0xff]
    %v202 = vld [vmem:[#allocation5 + $0x1d8] sm:$0xff]
    %v203 = vld [vmem:[#allocation5 + $0x1e0] sm:$0xff]
    %v204 = vld [vmem:[#allocation5 + $0x1e8] sm:$0xff]
    %v205 = vld [vmem:[#allocation5 + $0x1f0] sm:$0xff]
    %v206 = vld [vmem:[#allocation5 + $0x1f8] sm:$0xff]
    %v207 = vld [vmem:[#allocation5 + $0x200] sm:$0xff]
    %v208 = vld [vmem:[#allocation5 + $0x208] sm:$0xff]
    %v209 = vld [vmem:[#allocation5 + $0x210] sm:$0xff]
    %v210 = vld [vmem:[#allocation5 + $0x218] sm:$0xff]
    %v211 = vld [vmem:[#allocation5 + $0x220] sm:$0xff]
    %v212 = vld [vmem:[#allocation5 + $0x228] sm:$0xff]
    %v213 = vld [vmem:[#allocation5 + $0x230] sm:$0xff]
    %v214 = vld [vmem:[#allocation5 + $0x238] sm:$0xff]
    %v215 = vld [vmem:[#allocation5 + $0x240] sm:$0xff]
    %v216 = vld [vmem:[#allocation5 + $0x248] sm:$0xff]
    %v217 = vld [vmem:[#allocation5 + $0x250] sm:$0xff]
    %v218 = vld [vmem:[#allocation5 + $0x258] sm:$0xff]
    %v219 = vld [vmem:[#allocation5 + $0x260] sm:$0xff]
    %v220 = vld [vmem:[#allocation5 + $0x268] sm:$0xff]
    %v221 = vld [vmem:[#allocation5 + $0x270] sm:$0xff]
    %v222 = vld [vmem:[#allocation5 + $0x278] sm:$0xff]
    %v223 = vld [vmem:[#allocation5 + $0x280] sm:$0xff]
    %v224 = vld [vmem:[#allocation5 + $0x288] sm:$0xff]
    %v225 = vld [vmem:[#allocation5 + $0x290] sm:$0xff]
    %v226 = vld [vmem:[#allocation5 + $0x298] sm:$0xff]
    %v227 = vld [vmem:[#allocation5 + $0x2a0] sm:$0xff]
    %v228 = vld [vmem:[#allocation5 + $0x2a8] sm:$0xff]
    %v229 = vld [vmem:[#allocation5 + $0x2b0] sm:$0xff]
    %v230 = vld [vmem:[#allocation5 + $0x2b8] sm:$0xff]
    %v231 = vld [vmem:[#allocation5 + $0x2c0] sm:$0xff]
    %v232 = vld [vmem:[#allocation5 + $0x2c8] sm:$0xff]
    %v233 = vld [vmem:[#allocation5 + $0x2d0] sm:$0xff]
    %v234 = vld [vmem:[#allocation5 + $0x2d8] sm:$0xff]
    %v235 = vld [vmem:[#allocation5 + $0x2e0] sm:$0xff]
    %v236 = vld [vmem:[#allocation5 + $0x2e8] sm:$0xff]
    %v237 = vld [vmem:[#allocation5 + $0x2f0] sm:$0xff]
    %v238 = vld [vmem:[#allocation5 + $0x2f8] sm:$0xff]
    %v239 = vld [vmem:[#allocation5 + $0x300] sm:$0xff]
    %v240 = vld [vmem:[#allocation5 + $0x308] sm:$0xff]
    %v241 = vld [vmem:[%s2] sm:$0x3]
    %v243 = vlaneseq
    %v244 = vshrl.u32 %v243, 7
    %v245 = vsub.s32 0, %v244
    %v246 = vrot.slane %v241, %v245
    %v247 = vlaneseq
    %v248 = vshrl.u32 %v247, 7
    %v249 = vsub.s32 1, %v248
    %v250 = vrot.slane %v241, %v249
    %v351 = vunpack.c.l.b16 %v143
    %v352 = vunpack.c.h.b16 %v143
    %v353 = vunpack.c.l.b16 %v144
    %v354 = vunpack.c.h.b16 %v144
    %v355 = vunpack.c.l.b16 %v145
    %v356 = vunpack.c.h.b16 %v145
    %v357 = vunpack.c.l.b16 %v146
    %v358 = vunpack.c.h.b16 %v146
    %v359 = vunpack.c.l.b16 %v147
    %v360 = vunpack.c.h.b16 %v147
    %v361 = vunpack.c.l.b16 %v148
    %v362 = vunpack.c.h.b16 %v148
    %v363 = vunpack.c.l.b16 %v149
    %v364 = vunpack.c.h.b16 %v149
    %v365 = vunpack.c.l.b16 %v150
    %v366 = vunpack.c.h.b16 %v150
    %v367 = vunpack.c.l.b16 %v151
    %v368 = vunpack.c.h.b16 %v151
    %v369 = vunpack.c.l.b16 %v152
    %v370 = vunpack.c.h.b16 %v152
    %v371 = vunpack.c.l.b16 %v153
    %v372 = vunpack.c.h.b16 %v153
    %v373 = vunpack.c.l.b16 %v154
    %v374 = vunpack.c.h.b16 %v154
    %v375 = vunpack.c.l.b16 %v155
    %v376 = vunpack.c.h.b16 %v155
    %v377 = vunpack.c.l.b16 %v156
    %v378 = vunpack.c.h.b16 %v156
    %v379 = vunpack.c.l.b16 %v157
    %v380 = vunpack.c.h.b16 %v157
    %v381 = vunpack.c.l.b16 %v158
    %v382 = vunpack.c.h.b16 %v158
    %v383 = vunpack.c.l.b16 %v159
    %v384 = vunpack.c.h.b16 %v159
    %v385 = vunpack.c.l.b16 %v160
    %v386 = vunpack.c.h.b16 %v160
    %v387 = vunpack.c.l.b16 %v161
    %v388 = vunpack.c.h.b16 %v161
    %v389 = vunpack.c.l.b16 %v162
    %v390 = vunpack.c.h.b16 %v162
    %v391 = vunpack.c.l.b16 %v163
    %v392 = vunpack.c.h.b16 %v163
    %v393 = vunpack.c.l.b16 %v164
    %v394 = vunpack.c.h.b16 %v164
    %v395 = vunpack.c.l.b16 %v165
    %v396 = vunpack.c.h.b16 %v165
    %v397 = vunpack.c.l.b16 %v166
    %v398 = vunpack.c.h.b16 %v166
    %v399 = vunpack.c.l.b16 %v167
    %v400 = vunpack.c.h.b16 %v167
    %v401 = vunpack.c.l.b16 %v168
    %v402 = vunpack.c.h.b16 %v168
    %v403 = vunpack.c.l.b16 %v169
    %v404 = vunpack.c.h.b16 %v169
    %v405 = vunpack.c.l.b16 %v170
    %v406 = vunpack.c.h.b16 %v170
    %v407 = vunpack.c.l.b16 %v171
    %v408 = vunpack.c.h.b16 %v171
    %v409 = vunpack.c.l.b16 %v172
    %v410 = vunpack.c.h.b16 %v172
    %v411 = vunpack.c.l.b16 %v173
    %v412 = vunpack.c.h.b16 %v173
    %v413 = vunpack.c.l.b16 %v174
    %v414 = vunpack.c.h.b16 %v174
    %v415 = vunpack.c.l.b16 %v175
    %v416 = vunpack.c.h.b16 %v175
    %v417 = vunpack.c.l.b16 %v176
    %v418 = vunpack.c.h.b16 %v176
    %v419 = vunpack.c.l.b16 %v177
    %v420 = vunpack.c.h.b16 %v177
    %v421 = vunpack.c.l.b16 %v178
    %v422 = vunpack.c.h.b16 %v178
    %v423 = vunpack.c.l.b16 %v179
    %v424 = vunpack.c.h.b16 %v179
    %v425 = vunpack.c.l.b16 %v180
    %v426 = vunpack.c.h.b16 %v180
    %v427 = vunpack.c.l.b16 %v181
    %v428 = vunpack.c.h.b16 %v181
    %v429 = vunpack.c.l.b16 %v182
    %v430 = vunpack.c.h.b16 %v182
    %v431 = vunpack.c.l.b16 %v183
    %v432 = vunpack.c.h.b16 %v183
    %v433 = vunpack.c.l.b16 %v184
    %v434 = vunpack.c.h.b16 %v184
    %v435 = vunpack.c.l.b16 %v185
    %v436 = vunpack.c.h.b16 %v185
    %v437 = vunpack.c.l.b16 %v186
    %v438 = vunpack.c.h.b16 %v186
    %v439 = vunpack.c.l.b16 %v187
    %v440 = vunpack.c.h.b16 %v187
    %v441 = vunpack.c.l.b16 %v188
    %v442 = vunpack.c.h.b16 %v188
    %v443 = vunpack.c.l.b16 %v189
    %v444 = vunpack.c.h.b16 %v189
    %v445 = vunpack.c.l.b16 %v190
    %v446 = vunpack.c.h.b16 %v190
    %v447 = vunpack.c.l.b16 %v191
    %v448 = vunpack.c.h.b16 %v191
    %v449 = vunpack.c.l.b16 %v192
    %v450 = vunpack.c.h.b16 %v192
    %v451 = vunpack.c.l.b16 %v193
    %v452 = vunpack.c.h.b16 %v193
    %v453 = vunpack.c.l.b16 %v194
    %v454 = vunpack.c.h.b16 %v194
    %v455 = vunpack.c.l.b16 %v195
    %v456 = vunpack.c.h.b16 %v195
    %v457 = vunpack.c.l.b16 %v196
    %v458 = vunpack.c.h.b16 %v196
    %v459 = vunpack.c.l.b16 %v197
    %v460 = vunpack.c.h.b16 %v197
    %v461 = vunpack.c.l.b16 %v198
    %v462 = vunpack.c.h.b16 %v198
    %v463 = vunpack.c.l.b16 %v199
    %v464 = vunpack.c.h.b16 %v199
    %v465 = vunpack.c.l.b16 %v200
    %v466 = vunpack.c.h.b16 %v200
    %v467 = vunpack.c.l.b16 %v201
    %v468 = vunpack.c.h.b16 %v201
    %v469 = vunpack.c.l.b16 %v202
    %v470 = vunpack.c.h.b16 %v202
    %v471 = vunpack.c.l.b16 %v203
    %v472 = vunpack.c.h.b16 %v203
    %v473 = vunpack.c.l.b16 %v204
    %v474 = vunpack.c.h.b16 %v204
    %v475 = vunpack.c.l.b16 %v205
    %v476 = vunpack.c.h.b16 %v205
    %v477 = vunpack.c.l.b16 %v206
    %v478 = vunpack.c.h.b16 %v206
    %v479 = vunpack.c.l.b16 %v207
    %v480 = vunpack.c.h.b16 %v207
    %v481 = vunpack.c.l.b16 %v208
    %v482 = vunpack.c.h.b16 %v208
    %v483 = vunpack.c.l.b16 %v209
    %v484 = vunpack.c.h.b16 %v209
    %v485 = vunpack.c.l.b16 %v210
    %v486 = vunpack.c.h.b16 %v210
    %v487 = vunpack.c.l.b16 %v211
    %v488 = vunpack.c.h.b16 %v211
    %v489 = vunpack.c.l.b16 %v212
    %v490 = vunpack.c.h.b16 %v212
    %v491 = vunpack.c.l.b16 %v213
    %v492 = vunpack.c.h.b16 %v213
    %v493 = vunpack.c.l.b16 %v214
    %v494 = vunpack.c.h.b16 %v214
    %v495 = vunpack.c.l.b16 %v215
    %v496 = vunpack.c.h.b16 %v215
    %v497 = vunpack.c.l.b16 %v216
    %v498 = vunpack.c.h.b16 %v216
    %v499 = vunpack.c.l.b16 %v217
    %v500 = vunpack.c.h.b16 %v217
    %v501 = vunpack.c.l.b16 %v218
    %v502 = vunpack.c.h.b16 %v218
    %v503 = vunpack.c.l.b16 %v219
    %v504 = vunpack.c.h.b16 %v219
    %v505 = vunpack.c.l.b16 %v220
    %v506 = vunpack.c.h.b16 %v220
    %v507 = vunpack.c.l.b16 %v221
    %v508 = vunpack.c.h.b16 %v221
    %v509 = vunpack.c.l.b16 %v222
    %v510 = vunpack.c.h.b16 %v222
    %v511 = vunpack.c.l.b16 %v223
    %v512 = vunpack.c.h.b16 %v223
    %v513 = vunpack.c.l.b16 %v224
    %v514 = vunpack.c.h.b16 %v224
    %v515 = vunpack.c.l.b16 %v225
    %v516 = vunpack.c.h.b16 %v225
    %v517 = vunpack.c.l.b16 %v226
    %v518 = vunpack.c.h.b16 %v226
    %v519 = vunpack.c.l.b16 %v227
    %v520 = vunpack.c.h.b16 %v227
    %v521 = vunpack.c.l.b16 %v228
    %v522 = vunpack.c.h.b16 %v228
    %v523 = vunpack.c.l.b16 %v229
    %v524 = vunpack.c.h.b16 %v229
    %v525 = vunpack.c.l.b16 %v230
    %v526 = vunpack.c.h.b16 %v230
    %v527 = vunpack.c.l.b16 %v231
    %v528 = vunpack.c.h.b16 %v231
    %v529 = vunpack.c.l.b16 %v232
    %v530 = vunpack.c.h.b16 %v232
    %v531 = vunpack.c.l.b16 %v233
    %v532 = vunpack.c.h.b16 %v233
    %v533 = vunpack.c.l.b16 %v234
    %v534 = vunpack.c.h.b16 %v234
    %v535 = vunpack.c.l.b16 %v235
    %v536 = vunpack.c.h.b16 %v235
    %v537 = vunpack.c.l.b16 %v236
    %v538 = vunpack.c.h.b16 %v236
    %v539 = vunpack.c.l.b16 %v237
    %v540 = vunpack.c.h.b16 %v237
    %v541 = vunpack.c.l.b16 %v238
    %v542 = vunpack.c.h.b16 %v238
    %v543 = vunpack.c.l.b16 %v239
    %v544 = vunpack.c.h.b16 %v239
    %v545 = vunpack.c.l.b16 %v240
    %v546 = vunpack.c.h.b16 %v240
    %v547 = vpack.c.b16 %v353, %v351
    %v548 = vpack.c.b16 %v354, %v352
    %v549 = vpack.c.b16 %v357, %v355
    %v550 = vpack.c.b16 %v358, %v356
    %v551 = vpack.c.b16 %v361, %v359
    %v552 = vpack.c.b16 %v362, %v360
    %v553 = vpack.c.b16 %v365, %v363
    %v554 = vpack.c.b16 %v366, %v364
    %v555 = vpack.c.b16 %v369, %v367
    %v556 = vpack.c.b16 %v370, %v368
    %v557 = vpack.c.b16 %v373, %v371
    %v558 = vpack.c.b16 %v374, %v372
    %v559 = vpack.c.b16 %v377, %v375
    %v560 = vpack.c.b16 %v378, %v376
    %v561 = vpack.c.b16 %v381, %v379
    %v562 = vpack.c.b16 %v382, %v380
    %v563 = vpack.c.b16 %v385, %v383
    %v564 = vpack.c.b16 %v386, %v384
    %v565 = vpack.c.b16 %v389, %v387
    %v566 = vpack.c.b16 %v390, %v388
    %v567 = vpack.c.b16 %v393, %v391
    %v568 = vpack.c.b16 %v394, %v392
    %v569 = vpack.c.b16 %v397, %v395
    %v570 = vpack.c.b16 %v398, %v396
    %v571 = vpack.c.b16 %v401, %v399
    %v572 = vpack.c.b16 %v402, %v400
    %v573 = vpack.c.b16 %v405, %v403
    %v574 = vpack.c.b16 %v406, %v404
    %v575 = vpack.c.b16 %v409, %v407
    %v576 = vpack.c.b16 %v410, %v408
    %v577 = vpack.c.b16 %v413, %v411
    %v578 = vpack.c.b16 %v414, %v412
    %v579 = vpack.c.b16 %v417, %v415
    %v580 = vpack.c.b16 %v418, %v416
    %v581 = vpack.c.b16 %v421, %v419
    %v582 = vpack.c.b16 %v422, %v420
    %v583 = vpack.c.b16 %v425, %v423
    %v584 = vpack.c.b16 %v426, %v424
    %v585 = vpack.c.b16 %v429, %v427
    %v586 = vpack.c.b16 %v430, %v428
    %v587 = vpack.c.b16 %v433, %v431
    %v588 = vpack.c.b16 %v434, %v432
    %v589 = vpack.c.b16 %v437, %v435
    %v590 = vpack.c.b16 %v438, %v436
    %v591 = vpack.c.b16 %v441, %v439
    %v592 = vpack.c.b16 %v442, %v440
    %v593 = vpack.c.b16 %v445, %v443
    %v594 = vpack.c.b16 %v446, %v444
    %v595 = vpack.c.b16 %v449, %v447
    %v596 = vpack.c.b16 %v450, %v448
    %v597 = vpack.c.b16 %v453, %v451
    %v598 = vpack.c.b16 %v454, %v452
    %v599 = vpack.c.b16 %v457, %v455
    %v600 = vpack.c.b16 %v458, %v456
    %v601 = vpack.c.b16 %v461, %v459
    %v602 = vpack.c.b16 %v462, %v460
    %v603 = vpack.c.b16 %v465, %v463
    %v604 = vpack.c.b16 %v466, %v464
    %v605 = vpack.c.b16 %v469, %v467
    %v606 = vpack.c.b16 %v470, %v468
    %v607 = vpack.c.b16 %v473, %v471
    %v608 = vpack.c.b16 %v474, %v472
    %v609 = vpack.c.b16 %v477, %v475
    %v610 = vpack.c.b16 %v478, %v476
    %v611 = vpack.c.b16 %v481, %v479
    %v612 = vpack.c.b16 %v482, %v480
    %v613 = vpack.c.b16 %v485, %v483
    %v614 = vpack.c.b16 %v486, %v484
    %v615 = vpack.c.b16 %v489, %v487
    %v616 = vpack.c.b16 %v490, %v488
    %v617 = vpack.c.b16 %v493, %v491
    %v618 = vpack.c.b16 %v494, %v492
    %v619 = vpack.c.b16 %v497, %v495
    %v620 = vpack.c.b16 %v498, %v496
    %v621 = vpack.c.b16 %v501, %v499
    %v622 = vpack.c.b16 %v502, %v500
    %v623 = vpack.c.b16 %v505, %v503
    %v624 = vpack.c.b16 %v506, %v504
    %v625 = vpack.c.b16 %v509, %v507
    %v626 = vpack.c.b16 %v510, %v508
    %v627 = vpack.c.b16 %v513, %v511
    %v628 = vpack.c.b16 %v514, %v512
    %v629 = vpack.c.b16 %v517, %v515
    %v630 = vpack.c.b16 %v518, %v516
    %v631 = vpack.c.b16 %v521, %v519
    %v632 = vpack.c.b16 %v522, %v520
    %v633 = vpack.c.b16 %v525, %v523
    %v634 = vpack.c.b16 %v526, %v524
    %v635 = vpack.c.b16 %v529, %v527
    %v636 = vpack.c.b16 %v530, %v528
    %v637 = vpack.c.b16 %v533, %v531
    %v638 = vpack.c.b16 %v534, %v532
    %v639 = vpack.c.b16 %v537, %v535
    %v640 = vpack.c.b16 %v538, %v536
    %v641 = vpack.c.b16 %v541, %v539
    %v642 = vpack.c.b16 %v542, %v540
    %v643 = vpack.c.b16 %v545, %v543
    %v644 = vpack.c.b16 %v546, %v544
    %vm743 = vcmask 130048
    %v745 = vsel %vm743, %v142, 0
    %747 = vmatprep.subr.bf16.mxu0 %v548
    %748 = vmatpush1.bf16.msra.mxu0 %v547
    %749 = vmatprep.subr.bf16.mxu0 %v550
    %750 = vmatpush1.bf16.msra.mxu0 %v549
    %751 = vmatprep.subr.bf16.mxu0 %v552
    %752 = vmatpush1.bf16.msra.mxu0 %v551
    %753 = vmatprep.subr.bf16.mxu0 %v554
    %754 = vmatpush1.bf16.msra.mxu0 %v553
    %755 = vmatprep.subr.bf16.mxu0 %v556
    %756 = vmatpush1.bf16.msra.mxu0 %v555
    %757 = vmatprep.subr.bf16.mxu0 %v558
    %758 = vmatpush1.bf16.msra.mxu0 %v557
    %759 = vmatprep.subr.bf16.mxu0 %v560
    %760 = vmatpush1.bf16.msra.mxu0 %v559
    %761 = vmatprep.subr.bf16.mxu0 %v562
    %762 = vmatpush1.bf16.msra.mxu0 %v561
    %763 = vmatprep.subr.bf16.mxu0 %v564
    %764 = vmatpush1.bf16.msra.mxu0 %v563
    %765 = vmatprep.subr.bf16.mxu0 %v566
    %766 = vmatpush1.bf16.msra.mxu0 %v565
    %767 = vmatprep.subr.bf16.mxu0 %v568
    %768 = vmatpush1.bf16.msra.mxu0 %v567
    %769 = vmatprep.subr.bf16.mxu0 %v570
    %770 = vmatpush1.bf16.msra.mxu0 %v569
    %771 = vmatprep.subr.bf16.mxu0 %v572
    %772 = vmatpush1.bf16.msra.mxu0 %v571
    %773 = vmatprep.subr.bf16.mxu0 %v574
    %774 = vmatpush1.bf16.msra.mxu0 %v573
    %775 = vmatprep.subr.bf16.mxu0 %v576
    %776 = vmatpush1.bf16.msra.mxu0 %v575
    %777 = vmatprep.subr.bf16.mxu0 %v578
    %778 = vmatpush1.bf16.msra.mxu0 %v577
    %779 = vmatprep.mubr.bf16.mxu0 %v137
    %780 = vmatmul.mubr.bf16.gmra.mrb[0].mxu0 %v136
    %v781 = vpop.f32.mrb[0].mxu0
    %v782 = vadd.f32 %v246, %v781
    %v783 = vpop.f32.mrb[0].mxu0
    %v784 = vadd.f32 %v250, %v783
    %v785 = vpop.f32.mrb[0].mxu0
    %v786 = vadd.f32 %v246, %v785
    %v787 = vpop.f32.mrb[0].mxu0
    %v788 = vadd.f32 %v250, %v787
    %789 = vdwg.mxu0
    %790 = vmatprep.subr.bf16.mxu0 %v580
    %791 = vmatpush1.bf16.msra.mxu0 %v579
    %792 = vmatprep.subr.bf16.mxu0 %v582
    %793 = vmatpush1.bf16.msra.mxu0 %v581
    %794 = vmatprep.subr.bf16.mxu0 %v584
    %795 = vmatpush1.bf16.msra.mxu0 %v583
    %796 = vmatprep.subr.bf16.mxu0 %v586
    %797 = vmatpush1.bf16.msra.mxu0 %v585
    %798 = vmatprep.subr.bf16.mxu0 %v588
    %799 = vmatpush1.bf16.msra.mxu0 %v587
    %800 = vmatprep.subr.bf16.mxu0 %v590
    %801 = vmatpush1.bf16.msra.mxu0 %v589
    %802 = vmatprep.subr.bf16.mxu0 %v592
    %803 = vmatpush1.bf16.msra.mxu0 %v591
    %804 = vmatprep.subr.bf16.mxu0 %v594
    %805 = vmatpush1.bf16.msra.mxu0 %v593
    %806 = vmatprep.subr.bf16.mxu0 %v596
    %807 = vmatpush1.bf16.msra.mxu0 %v595
    %808 = vmatprep.subr.bf16.mxu0 %v598
    %809 = vmatpush1.bf16.msra.mxu0 %v597
    %810 = vmatprep.subr.bf16.mxu0 %v600
    %811 = vmatpush1.bf16.msra.mxu0 %v599
    %812 = vmatprep.subr.bf16.mxu0 %v602
    %813 = vmatpush1.bf16.msra.mxu0 %v601
    %814 = vmatprep.subr.bf16.mxu0 %v604
    %815 = vmatpush1.bf16.msra.mxu0 %v603
    %816 = vmatprep.subr.bf16.mxu0 %v606
    %817 = vmatpush1.bf16.msra.mxu0 %v605
    %818 = vmatprep.subr.bf16.mxu0 %v608
    %819 = vmatpush1.bf16.msra.mxu0 %v607
    %820 = vmatprep.subr.bf16.mxu0 %v610
    %821 = vmatpush1.bf16.msra.mxu0 %v609
    %822 = vmatprep.mubr.bf16.mxu0 %v139
    %823 = vmatmul.mubr.bf16.gmra.mrb[0].mxu0 %v138
    %v824 = vpop.f32.mrb[0].mxu0
    %v825 = vadd.f32 %v782, %v824
    %v826 = vpop.f32.mrb[0].mxu0
    %v827 = vadd.f32 %v784, %v826
    %v828 = vpop.f32.mrb[0].mxu0
    %v829 = vadd.f32 %v786, %v828
    %v830 = vpop.f32.mrb[0].mxu0
    %v831 = vadd.f32 %v788, %v830
    %832 = vdwg.mxu0
    %833 = vmatprep.subr.bf16.mxu0 %v612
    %834 = vmatpush1.bf16.msra.mxu0 %v611
    %835 = vmatprep.subr.bf16.mxu0 %v614
    %836 = vmatpush1.bf16.msra.mxu0 %v613
    %837 = vmatprep.subr.bf16.mxu0 %v616
    %838 = vmatpush1.bf16.msra.mxu0 %v615
    %839 = vmatprep.subr.bf16.mxu0 %v618
    %840 = vmatpush1.bf16.msra.mxu0 %v617
    %841 = vmatprep.subr.bf16.mxu0 %v620
    %842 = vmatpush1.bf16.msra.mxu0 %v619
    %843 = vmatprep.subr.bf16.mxu0 %v622
    %844 = vmatpush1.bf16.msra.mxu0 %v621
    %845 = vmatprep.subr.bf16.mxu0 %v624
    %846 = vmatpush1.bf16.msra.mxu0 %v623
    %847 = vmatprep.subr.bf16.mxu0 %v626
    %848 = vmatpush1.bf16.msra.mxu0 %v625
    %849 = vmatprep.subr.bf16.mxu0 %v628
    %850 = vmatpush1.bf16.msra.mxu0 %v627
    %851 = vmatprep.subr.bf16.mxu0 %v630
    %852 = vmatpush1.bf16.msra.mxu0 %v629
    %853 = vmatprep.subr.bf16.mxu0 %v632
    %854 = vmatpush1.bf16.msra.mxu0 %v631
    %855 = vmatprep.subr.bf16.mxu0 %v634
    %856 = vmatpush1.bf16.msra.mxu0 %v633
    %857 = vmatprep.subr.bf16.mxu0 %v636
    %858 = vmatpush1.bf16.msra.mxu0 %v635
    %859 = vmatprep.subr.bf16.mxu0 %v638
    %860 = vmatpush1.bf16.msra.mxu0 %v637
    %861 = vmatprep.subr.bf16.mxu0 %v640
    %862 = vmatpush1.bf16.msra.mxu0 %v639
    %863 = vmatprep.subr.bf16.mxu0 %v642
    %864 = vmatpush1.bf16.msra.mxu0 %v641
    %865 = vmatprep.mubr.bf16.mxu0 %v141
    %866 = vmatmul.mubr.bf16.gmra.mrb[0].mxu0 %v140
    %v867 = vpop.f32.mrb[0].mxu0
    %v868 = vadd.f32 %v825, %v867
    %v869 = vpop.f32.mrb[0].mxu0
    %v870 = vadd.f32 %v827, %v869
    %v871 = vpop.f32.mrb[0].mxu0
    %v872 = vadd.f32 %v829, %v871
    %v873 = vpop.f32.mrb[0].mxu0
    %v874 = vadd.f32 %v831, %v873
    %875 = vdwg.mxu0
    %876 = vmatprep.subr.bf16.mxu0 %v644
    %877 = vmatpush1.bf16.msra.mxu0 %v643
    %878 = vmatprep.subr.bf16.mxu0 0
    %879 = vmatpush1.bf16.msra.mxu0 0
    %880 = vmatprep.subr.bf16.mxu0 0
    %881 = vmatpush1.bf16.msra.mxu0 0
    %882 = vmatprep.subr.bf16.mxu0 0
    %883 = vmatpush1.bf16.msra.mxu0 0
    %884 = vmatprep.subr.bf16.mxu0 0
    %885 = vmatpush1.bf16.msra.mxu0 0
    %886 = vmatprep.subr.bf16.mxu0 0
    %887 = vmatpush1.bf16.msra.mxu0 0
    %888 = vmatprep.subr.bf16.mxu0 0
    %889 = vmatpush1.bf16.msra.mxu0 0
    %890 = vmatprep.subr.bf16.mxu0 0
    %891 = vmatpush1.bf16.msra.mxu0 0
    %892 = vmatprep.subr.bf16.mxu0 0
    %893 = vmatpush1.bf16.msra.mxu0 0
    %894 = vmatprep.subr.bf16.mxu0 0
    %895 = vmatpush1.bf16.msra.mxu0 0
    %896 = vmatprep.subr.bf16.mxu0 0
    %897 = vmatpush1.bf16.msra.mxu0 0
    %898 = vmatprep.subr.bf16.mxu0 0
    %899 = vmatpush1.bf16.msra.mxu0 0
    %900 = vmatprep.subr.bf16.mxu0 0
    %901 = vmatpush1.bf16.msra.mxu0 0
    %902 = vmatprep.subr.bf16.mxu0 0
    %903 = vmatpush1.bf16.msra.mxu0 0
    %904 = vmatprep.subr.bf16.mxu0 0
    %905 = vmatpush1.bf16.msra.mxu0 0
    %906 = vmatprep.subr.bf16.mxu0 0
    %907 = vmatpush1.bf16.msra.mxu0 0
    %908 = vmatprep.mubr.bf16.mxu0 0
    %909 = vmatmul.mubr.bf16.gmra.mrb[0].mxu0 %v745
    %v910 = vpop.f32.mrb[0].mxu0
    %v911 = vadd.f32 %v868, %v910
    %v912 = vpop.f32.mrb[0].mxu0
    %v913 = vadd.f32 %v870, %v912
    %v914 = vpop.f32.mrb[0].mxu0
    %v915 = vadd.f32 %v872, %v914
    %v916 = vpop.f32.mrb[0].mxu0
    %v917 = vadd.f32 %v874, %v916
    %918 = vdwg.mxu0
    %v919 = vsub.f32 0.0, %v911
    %v920 = vsub.f32 0.0, %v913
    %v921 = vsub.f32 0.0, %v915
    %v922 = vsub.f32 0.0, %v917
    %v923 = vmul.f32 %v919, 1.442695
    %v924 = vpow.pop %v923
    %v925 = vmul.f32 %v920, 1.442695
    %v926 = vpow.pop %v925
    %v927 = vmul.f32 %v921, 1.442695
    %v928 = vpow.pop %v927
    %v929 = vmul.f32 %v922, 1.442695
    %v930 = vpow.pop %v929
    %v931 = vadd.f32 %v924, 1.0
    %v932 = vadd.f32 %v926, 1.0
    %v933 = vadd.f32 %v928, 1.0
    %v934 = vadd.f32 %v930, 1.0
    %v935 = vrcp.pop %v931
    %v936 = vrcp.pop %v932
    %v937 = vrcp.pop %v933
    %v938 = vrcp.pop %v934
    %v939 = vpack.c.bf16 %v937, %v935
    %v940 = vpack.c.bf16 %v938, %v936
    %v941 = vld [vmem:[#allocation7] sm:$0xf]
    %v942 = vld [vmem:[#allocation7 + $0x4] sm:$0xf]
    %v943 = vld [vmem:[#allocation7 + $0x8] sm:$0xf]
    %v944 = vld [vmem:[#allocation7 + $0xc] sm:$0xf]
    %v945 = vld [vmem:[#allocation7 + $0x10] sm:$0xf]
    %v946 = vld [vmem:[#allocation7 + $0x14] sm:$0xf]
    %v947 = vld [vmem:[#allocation7 + $0x18] sm:$0xf]
    %v948 = vld [vmem:[#allocation7 + $0x1c] sm:$0xf]
    %v949 = vld [vmem:[#allocation7 + $0x20] sm:$0xf]
    %v950 = vld [vmem:[#allocation7 + $0x24] sm:$0xf]
    %v951 = vld [vmem:[#allocation7 + $0x28] sm:$0xf]
    %v952 = vld [vmem:[#allocation7 + $0x2c] sm:$0xf]
    %v953 = vld [vmem:[#allocation7 + $0x30] sm:$0xf]
    %v954 = vld [vmem:[#allocation7 + $0x34] sm:$0xf]
    %v955 = vld [vmem:[#allocation7 + $0x38] sm:$0xf]
    %v956 = vld [vmem:[#allocation7 + $0x3c] sm:$0xf]
    %v957 = vld [vmem:[#allocation7 + $0x40] sm:$0xf]
    %v958 = vld [vmem:[#allocation7 + $0x44] sm:$0xf]
    %v959 = vld [vmem:[#allocation7 + $0x48] sm:$0xf]
    %v960 = vld [vmem:[#allocation7 + $0x4c] sm:$0xf]
    %v961 = vld [vmem:[#allocation7 + $0x50] sm:$0xf]
    %v962 = vld [vmem:[#allocation7 + $0x54] sm:$0xf]
    %v963 = vld [vmem:[#allocation7 + $0x58] sm:$0xf]
    %v964 = vld [vmem:[#allocation7 + $0x5c] sm:$0xf]
    %v965 = vld [vmem:[#allocation7 + $0x60] sm:$0xf]
    %v966 = vld [vmem:[#allocation7 + $0x64] sm:$0xf]
    %v967 = vld [vmem:[#allocation7 + $0x68] sm:$0xf]
    %v968 = vld [vmem:[#allocation7 + $0x6c] sm:$0xf]
    %v969 = vld [vmem:[#allocation7 + $0x70] sm:$0xf]
    %v970 = vld [vmem:[#allocation7 + $0x74] sm:$0xf]
    %v971 = vld [vmem:[#allocation7 + $0x78] sm:$0xf]
    %v972 = vld [vmem:[#allocation7 + $0x7c] sm:$0xf]
    %v973 = vld [vmem:[%s4] sm:$0x1]
    %v975 = vlaneseq
    %v976 = vshrl.u32 %v975, 7
    %v977 = vsub.s32 0, %v976
    %v978 = vrot.slane %v973, %v977
    %v1012 = vunpack.c.l.b16 %v941
    %v1013 = vunpack.c.l.b16 %v942
    %v1014 = vunpack.c.l.b16 %v943
    %v1015 = vunpack.c.l.b16 %v944
    %v1016 = vunpack.c.l.b16 %v945
    %v1017 = vunpack.c.l.b16 %v946
    %v1018 = vunpack.c.l.b16 %v947
    %v1019 = vunpack.c.l.b16 %v948
    %v1020 = vunpack.c.l.b16 %v949
    %v1021 = vunpack.c.l.b16 %v950
    %v1022 = vunpack.c.l.b16 %v951
    %v1023 = vunpack.c.l.b16 %v952
    %v1024 = vunpack.c.l.b16 %v953
    %v1025 = vunpack.c.l.b16 %v954
    %v1026 = vunpack.c.l.b16 %v955
    %v1027 = vunpack.c.l.b16 %v956
    %v1028 = vunpack.c.l.b16 %v957
    %v1029 = vunpack.c.l.b16 %v958
    %v1030 = vunpack.c.l.b16 %v959
    %v1031 = vunpack.c.l.b16 %v960
    %v1032 = vunpack.c.l.b16 %v961
    %v1033 = vunpack.c.l.b16 %v962
    %v1034 = vunpack.c.l.b16 %v963
    %v1035 = vunpack.c.l.b16 %v964
    %v1036 = vunpack.c.l.b16 %v965
    %v1037 = vunpack.c.l.b16 %v966
    %v1038 = vunpack.c.l.b16 %v967
    %v1039 = vunpack.c.l.b16 %v968
    %v1040 = vunpack.c.l.b16 %v969
    %v1041 = vunpack.c.l.b16 %v970
    %v1042 = vunpack.c.l.b16 %v971
    %v1043 = vunpack.c.l.b16 %v972
    %v1044 = vpack.c.b16 %v1013, %v1012
    %v1045 = vpack.c.b16 %v1015, %v1014
    %v1046 = vpack.c.b16 %v1017, %v1016
    %v1047 = vpack.c.b16 %v1019, %v1018
    %v1048 = vpack.c.b16 %v1021, %v1020
    %v1049 = vpack.c.b16 %v1023, %v1022
    %v1050 = vpack.c.b16 %v1025, %v1024
    %v1051 = vpack.c.b16 %v1027, %v1026
    %v1052 = vpack.c.b16 %v1029, %v1028
    %v1053 = vpack.c.b16 %v1031, %v1030
    %v1054 = vpack.c.b16 %v1033, %v1032
    %v1055 = vpack.c.b16 %v1035, %v1034
    %v1056 = vpack.c.b16 %v1037, %v1036
    %v1057 = vpack.c.b16 %v1039, %v1038
    %v1058 = vpack.c.b16 %v1041, %v1040
    %v1059 = vpack.c.b16 %v1043, %v1042
    %1076 = vmatprep.subr.bf16.mxu0 0
    %1077 = vmatpush1.bf16.msra.mxu0 %v1044
    %1078 = vmatprep.subr.bf16.mxu0 0
    %1079 = vmatpush1.bf16.msra.mxu0 %v1045
    %1080 = vmatprep.subr.bf16.mxu0 0
    %1081 = vmatpush1.bf16.msra.mxu0 %v1046
    %1082 = vmatprep.subr.bf16.mxu0 0
    %1083 = vmatpush1.bf16.msra.mxu0 %v1047
    %1084 = vmatprep.subr.bf16.mxu0 0
    %1085 = vmatpush1.bf16.msra.mxu0 %v1048
    %1086 = vmatprep.subr.bf16.mxu0 0
    %1087 = vmatpush1.bf16.msra.mxu0 %v1049
    %1088 = vmatprep.subr.bf16.mxu0 0
    %1089 = vmatpush1.bf16.msra.mxu0 %v1050
    %1090 = vmatprep.subr.bf16.mxu0 0
    %1091 = vmatpush1.bf16.msra.mxu0 %v1051
    %1092 = vmatprep.subr.bf16.mxu0 0
    %1093 = vmatpush1.bf16.msra.mxu0 %v1052
    %1094 = vmatprep.subr.bf16.mxu0 0
    %1095 = vmatpush1.bf16.msra.mxu0 %v1053
    %1096 = vmatprep.subr.bf16.mxu0 0
    %1097 = vmatpush1.bf16.msra.mxu0 %v1054
    %1098 = vmatprep.subr.bf16.mxu0 0
    %1099 = vmatpush1.bf16.msra.mxu0 %v1055
    %1100 = vmatprep.subr.bf16.mxu0 0
    %1101 = vmatpush1.bf16.msra.mxu0 %v1056
    %1102 = vmatprep.subr.bf16.mxu0 0
    %1103 = vmatpush1.bf16.msra.mxu0 %v1057
    %1104 = vmatprep.subr.bf16.mxu0 0
    %1105 = vmatpush1.bf16.msra.mxu0 %v1058
    %1106 = vmatprep.subr.bf16.mxu0 0
    %1107 = vmatpush1.bf16.msra.mxu0 %v1059
    %1108 = vmatprep.mubr.bf16.mxu0 %v940
    %1109 = vmatmul.mubr.bf16.gmra.mrb[0].mxu0 %v939
    %v1110 = vpop.f32.mrb[0].mxu0
    %v1111 = vadd.f32 %v978, %v1110
    %v1112 = vpop.f32.mrb[0].mxu0
    %v1113 = vpop.f32.mrb[0].mxu0
    %v1114 = vadd.f32 %v978, %v1113
    %v1115 = vpop.f32.mrb[0].mxu0
    %1116 = vdwg.mxu0
    %v1117 = vsub.f32 0.0, %v1111
    %v1118 = vsub.f32 0.0, %v1114
    %v1119 = vmul.f32 %v1117, 1.442695
    %v1120 = vpow.pop %v1119
    %v1121 = vmul.f32 %v1118, 1.442695
    %v1122 = vpow.pop %v1121
    %v1123 = vadd.f32 %v1120, 1.0
    %v1124 = vadd.f32 %v1122, 1.0
    %v1125 = vrcp.pop %v1123
    %v1126 = vrcp.pop %v1124
    %v1127 = vpack.c.bf16 %v1126, %v1125
    %v1128 = vld [vmem:[#allocation8] sm:$0xf]
    %v1129 = vld [vmem:[#allocation8 + $0x4] sm:$0xf]
    %v1130 = vld [vmem:[#allocation8 + $0x8] sm:$0xf]
    %v1131 = vld [vmem:[#allocation8 + $0xc] sm:$0xf]
    %v1132 = vld [vmem:[#allocation8 + $0x10] sm:$0xf]
    %v1133 = vld [vmem:[#allocation8 + $0x14] sm:$0xf]
    %v1134 = vld [vmem:[#allocation8 + $0x18] sm:$0xf]
    %v1135 = vld [vmem:[#allocation8 + $0x1c] sm:$0xf]
    %v1136 = vld [vmem:[#allocation8 + $0x20] sm:$0xf]
    %v1137 = vld [vmem:[#allocation8 + $0x24] sm:$0xf]
    %v1138 = vld [vmem:[#allocation8 + $0x28] sm:$0xf]
    %v1139 = vld [vmem:[#allocation8 + $0x2c] sm:$0xf]
    %v1140 = vld [vmem:[#allocation8 + $0x30] sm:$0xf]
    %v1141 = vld [vmem:[#allocation8 + $0x34] sm:$0xf]
    %v1142 = vld [vmem:[#allocation8 + $0x38] sm:$0xf]
    %v1143 = vld [vmem:[#allocation8 + $0x3c] sm:$0xf]
    %v1144 = vld [vmem:[%s6] sm:$0x1]
    %v1146 = vlaneseq
    %v1147 = vshrl.u32 %v1146, 7
    %v1148 = vsub.s32 0, %v1147
    %v1149 = vrot.slane %v1144, %v1148
    %v1167 = vunpack.c.l.b16 %v1128
    %v1168 = vunpack.c.l.b16 %v1129
    %v1169 = vunpack.c.l.b16 %v1130
    %v1170 = vunpack.c.l.b16 %v1131
    %v1171 = vunpack.c.l.b16 %v1132
    %v1172 = vunpack.c.l.b16 %v1133
    %v1173 = vunpack.c.l.b16 %v1134
    %v1174 = vunpack.c.l.b16 %v1135
    %v1175 = vunpack.c.l.b16 %v1136
    %v1176 = vunpack.c.l.b16 %v1137
    %v1177 = vunpack.c.l.b16 %v1138
    %v1178 = vunpack.c.l.b16 %v1139
    %v1179 = vunpack.c.l.b16 %v1140
    %v1180 = vunpack.c.l.b16 %v1141
    %v1181 = vunpack.c.l.b16 %v1142
    %v1182 = vunpack.c.l.b16 %v1143
    %v1183 = vpack.c.b16 %v1168, %v1167
    %v1184 = vpack.c.b16 %v1170, %v1169
    %v1185 = vpack.c.b16 %v1172, %v1171
    %v1186 = vpack.c.b16 %v1174, %v1173
    %v1187 = vpack.c.b16 %v1176, %v1175
    %v1188 = vpack.c.b16 %v1178, %v1177
    %v1189 = vpack.c.b16 %v1180, %v1179
    %v1190 = vpack.c.b16 %v1182, %v1181
    %1199 = vmatprep.subr.bf16.mxu0 0
    %1200 = vmatpush1.bf16.msra.mxu0 %v1183
    %1201 = vmatprep.subr.bf16.mxu0 0
    %1202 = vmatpush1.bf16.msra.mxu0 %v1184
    %1203 = vmatprep.subr.bf16.mxu0 0
    %1204 = vmatpush1.bf16.msra.mxu0 %v1185
    %1205 = vmatprep.subr.bf16.mxu0 0
    %1206 = vmatpush1.bf16.msra.mxu0 %v1186
    %1207 = vmatprep.subr.bf16.mxu0 0
    %1208 = vmatpush1.bf16.msra.mxu0 %v1187
    %1209 = vmatprep.subr.bf16.mxu0 0
    %1210 = vmatpush1.bf16.msra.mxu0 %v1188
    %1211 = vmatprep.subr.bf16.mxu0 0
    %1212 = vmatpush1.bf16.msra.mxu0 %v1189
    %1213 = vmatprep.subr.bf16.mxu0 0
    %1214 = vmatpush1.bf16.msra.mxu0 %v1190
    %1215 = vmatprep.subr.bf16.mxu0 0
    %1216 = vmatpush1.bf16.msra.mxu0 0
    %1217 = vmatprep.subr.bf16.mxu0 0
    %1218 = vmatpush1.bf16.msra.mxu0 0
    %1219 = vmatprep.subr.bf16.mxu0 0
    %1220 = vmatpush1.bf16.msra.mxu0 0
    %1221 = vmatprep.subr.bf16.mxu0 0
    %1222 = vmatpush1.bf16.msra.mxu0 0
    %1223 = vmatprep.subr.bf16.mxu0 0
    %1224 = vmatpush1.bf16.msra.mxu0 0
    %1225 = vmatprep.subr.bf16.mxu0 0
    %1226 = vmatpush1.bf16.msra.mxu0 0
    %1227 = vmatprep.subr.bf16.mxu0 0
    %1228 = vmatpush1.bf16.msra.mxu0 0
    %1229 = vmatprep.subr.bf16.mxu0 0
    %1230 = vmatpush1.bf16.msra.mxu0 0
    %1231 = vmatprep.mubr.bf16.mxu0 0
    %1232 = vmatmul.mubr.bf16.gmra.mrb[0].mxu0 %v1127
    %v1233 = vpop.f32.mrb[0].mxu0
    %v1234 = vadd.f32 %v1149, %v1233
    %v1235 = vpop.f32.mrb[0].mxu0
    %v1236 = vpop.f32.mrb[0].mxu0
    %v1237 = vadd.f32 %v1149, %v1236
    %v1238 = vpop.f32.mrb[0].mxu0
    %1239 = vdwg.mxu0
    %v1240 = vsub.f32 0.0, %v1234
    %v1241 = vsub.f32 0.0, %v1237
    %v1242 = vmul.f32 %v1240, 1.442695
    %v1243 = vpow.pop %v1242
    %v1244 = vmul.f32 %v1241, 1.442695
    %v1245 = vpow.pop %v1244
    %v1246 = vadd.f32 %v1243, 1.0
    %v1247 = vadd.f32 %v1245, 1.0
    %v1248 = vrcp.pop %v1246
    %v1249 = vrcp.pop %v1247
    %v1250 = vpack.c.bf16 %v1249, %v1248
    %v1251 = vld [vmem:[#allocation10] sm:$0xf]
    %v1252 = vld [vmem:[#allocation10 + $0x4] sm:$0xf]
    %v1253 = vld [vmem:[#allocation10 + $0x8] sm:$0xf]
    %v1254 = vld [vmem:[#allocation10 + $0xc] sm:$0xf]
    %v1255 = vld [vmem:[#allocation10 + $0x10] sm:$0xf]
    %v1256 = vld [vmem:[#allocation10 + $0x14] sm:$0xf]
    %v1257 = vld [vmem:[#allocation10 + $0x18] sm:$0xf]
    %v1258 = vld [vmem:[#allocation10 + $0x1c] sm:$0xf]
    %v1259 = vld [vmem:[#allocation10 + $0x20] sm:$0xf]
    %v1260 = vld [vmem:[#allocation10 + $0x24] sm:$0xf]
    %v1261 = vld [vmem:[#allocation10 + $0x28] sm:$0xf]
    %v1262 = vld [vmem:[#allocation10 + $0x2c] sm:$0xf]
    %v1263 = vld [vmem:[#allocation10 + $0x30] sm:$0xf]
    %v1264 = vld [vmem:[#allocation10 + $0x34] sm:$0xf]
    %v1265 = vld [vmem:[#allocation10 + $0x38] sm:$0xf]
    %v1266 = vld [vmem:[#allocation10 + $0x3c] sm:$0xf]
    %v1267 = vld [vmem:[%s8] sm:$0x1]
    %v1269 = vlaneseq
    %v1270 = vshrl.u32 %v1269, 7
    %v1271 = vsub.s32 0, %v1270
    %v1272 = vrot.slane %v1267, %v1271
    %v1290 = vunpack.c.l.b16 %v1251
    %v1291 = vunpack.c.l.b16 %v1252
    %v1292 = vunpack.c.l.b16 %v1253
    %v1293 = vunpack.c.l.b16 %v1254
    %v1294 = vunpack.c.l.b16 %v1255
    %v1295 = vunpack.c.l.b16 %v1256
    %v1296 = vunpack.c.l.b16 %v1257
    %v1297 = vunpack.c.l.b16 %v1258
    %v1298 = vunpack.c.l.b16 %v1259
    %v1299 = vunpack.c.l.b16 %v1260
    %v1300 = vunpack.c.l.b16 %v1261
    %v1301 = vunpack.c.l.b16 %v1262
    %v1302 = vunpack.c.l.b16 %v1263
    %v1303 = vunpack.c.l.b16 %v1264
    %v1304 = vunpack.c.l.b16 %v1265
    %v1305 = vunpack.c.l.b16 %v1266
    %v1306 = vpack.c.b16 %v1291, %v1290
    %v1307 = vpack.c.b16 %v1293, %v1292
    %v1308 = vpack.c.b16 %v1295, %v1294
    %v1309 = vpack.c.b16 %v1297, %v1296
    %v1310 = vpack.c.b16 %v1299, %v1298
    %v1311 = vpack.c.b16 %v1301, %v1300
    %v1312 = vpack.c.b16 %v1303, %v1302
    %v1313 = vpack.c.b16 %v1305, %v1304
    %1322 = vmatprep.subr.bf16.mxu0 0
    %1323 = vmatpush1.bf16.msra.mxu0 %v1306
    %1324 = vmatprep.subr.bf16.mxu0 0
    %1325 = vmatpush1.bf16.msra.mxu0 %v1307
    %1326 = vmatprep.subr.bf16.mxu0 0
    %1327 = vmatpush1.bf16.msra.mxu0 %v1308
    %1328 = vmatprep.subr.bf16.mxu0 0
    %1329 = vmatpush1.bf16.msra.mxu0 %v1309
    %1330 = vmatprep.subr.bf16.mxu0 0
    %1331 = vmatpush1.bf16.msra.mxu0 %v1310
    %1332 = vmatprep.subr.bf16.mxu0 0
    %1333 = vmatpush1.bf16.msra.mxu0 %v1311
    %1334 = vmatprep.subr.bf16.mxu0 0
    %1335 = vmatpush1.bf16.msra.mxu0 %v1312
    %1336 = vmatprep.subr.bf16.mxu0 0
    %1337 = vmatpush1.bf16.msra.mxu0 %v1313
    %1338 = vmatprep.subr.bf16.mxu0 0
    %1339 = vmatpush1.bf16.msra.mxu0 0
    %1340 = vmatprep.subr.bf16.mxu0 0
    %1341 = vmatpush1.bf16.msra.mxu0 0
    %1342 = vmatprep.subr.bf16.mxu0 0
    %1343 = vmatpush1.bf16.msra.mxu0 0
    %1344 = vmatprep.subr.bf16.mxu0 0
    %1345 = vmatpush1.bf16.msra.mxu0 0
    %1346 = vmatprep.subr.bf16.mxu0 0
    %1347 = vmatpush1.bf16.msra.mxu0 0
    %1348 = vmatprep.subr.bf16.mxu0 0
    %1349 = vmatpush1.bf16.msra.mxu0 0
    %1350 = vmatprep.subr.bf16.mxu0 0
    %1351 = vmatpush1.bf16.msra.mxu0 0
    %1352 = vmatprep.subr.bf16.mxu0 0
    %1353 = vmatpush1.bf16.msra.mxu0 0
    %1354 = vmatprep.mubr.bf16.mxu0 0
    %1355 = vmatmul.mubr.bf16.gmra.mrb[0].mxu0 %v1250
    %v1356 = vpop.f32.mrb[0].mxu0
    %v1357 = vadd.f32 %v1272, %v1356
    %v1358 = vpop.f32.mrb[0].mxu0
    %v1359 = vpop.f32.mrb[0].mxu0
    %v1360 = vadd.f32 %v1272, %v1359
    %v1361 = vpop.f32.mrb[0].mxu0
    %1362 = vdwg.mxu0
    %v1363 = vsub.f32 0.0, %v1357
    %v1364 = vsub.f32 0.0, %v1360
    %v1365 = vmul.f32 %v1363, 1.442695
    %v1366 = vpow.pop %v1365
    %v1367 = vmul.f32 %v1364, 1.442695
    %v1368 = vpow.pop %v1367
    %v1369 = vadd.f32 %v1366, 1.0
    %v1370 = vadd.f32 %v1368, 1.0
    %v1371 = vrcp.pop %v1369
    %v1372 = vrcp.pop %v1370
    %v1373 = vpack.c.bf16 %v1372, %v1371
    %v1374 = vld [vmem:[#allocation11] sm:$0xf]
    %v1375 = vld [vmem:[#allocation11 + $0x4] sm:$0xf]
    %v1376 = vld [vmem:[#allocation11 + $0x8] sm:$0xf]
    %v1377 = vld [vmem:[#allocation11 + $0xc] sm:$0xf]
    %v1378 = vld [vmem:[#allocation11 + $0x10] sm:$0xf]
    %v1379 = vld [vmem:[#allocation11 + $0x14] sm:$0xf]
    %v1380 = vld [vmem:[#allocation11 + $0x18] sm:$0xf]
    %v1381 = vld [vmem:[#allocation11 + $0x1c] sm:$0xf]
    %v1382 = vld [vmem:[#allocation11 + $0x20] sm:$0xf]
    %v1383 = vld [vmem:[#allocation11 + $0x24] sm:$0xf]
    %v1384 = vld [vmem:[#allocation11 + $0x28] sm:$0xf]
    %v1385 = vld [vmem:[#allocation11 + $0x2c] sm:$0xf]
    %v1386 = vld [vmem:[#allocation11 + $0x30] sm:$0xf]
    %v1387 = vld [vmem:[#allocation11 + $0x34] sm:$0xf]
    %v1388 = vld [vmem:[#allocation11 + $0x38] sm:$0xf]
    %v1389 = vld [vmem:[#allocation11 + $0x3c] sm:$0xf]
    %v1390 = vld [vmem:[%s10] sm:$0x1]
    %v1392 = vlaneseq
    %v1393 = vshrl.u32 %v1392, 7
    %v1394 = vsub.s32 0, %v1393
    %v1395 = vrot.slane %v1390, %v1394
    %v1413 = vunpack.c.l.b16 %v1374
    %v1414 = vunpack.c.l.b16 %v1375
    %v1415 = vunpack.c.l.b16 %v1376
    %v1416 = vunpack.c.l.b16 %v1377
    %v1417 = vunpack.c.l.b16 %v1378
    %v1418 = vunpack.c.l.b16 %v1379
    %v1419 = vunpack.c.l.b16 %v1380
    %v1420 = vunpack.c.l.b16 %v1381
    %v1421 = vunpack.c.l.b16 %v1382
    %v1422 = vunpack.c.l.b16 %v1383
    %v1423 = vunpack.c.l.b16 %v1384
    %v1424 = vunpack.c.l.b16 %v1385
    %v1425 = vunpack.c.l.b16 %v1386
    %v1426 = vunpack.c.l.b16 %v1387
    %v1427 = vunpack.c.l.b16 %v1388
    %v1428 = vunpack.c.l.b16 %v1389
    %v1429 = vpack.c.b16 %v1414, %v1413
    %v1430 = vpack.c.b16 %v1416, %v1415
    %v1431 = vpack.c.b16 %v1418, %v1417
    %v1432 = vpack.c.b16 %v1420, %v1419
    %v1433 = vpack.c.b16 %v1422, %v1421
    %v1434 = vpack.c.b16 %v1424, %v1423
    %v1435 = vpack.c.b16 %v1426, %v1425
    %v1436 = vpack.c.b16 %v1428, %v1427
    %1445 = vmatprep.subr.bf16.mxu0 0
    %1446 = vmatpush1.bf16.msra.mxu0 %v1429
    %1447 = vmatprep.subr.bf16.mxu0 0
    %1448 = vmatpush1.bf16.msra.mxu0 %v1430
    %1449 = vmatprep.subr.bf16.mxu0 0
    %1450 = vmatpush1.bf16.msra.mxu0 %v1431
    %1451 = vmatprep.subr.bf16.mxu0 0
    %1452 = vmatpush1.bf16.msra.mxu0 %v1432
    %1453 = vmatprep.subr.bf16.mxu0 0
    %1454 = vmatpush1.bf16.msra.mxu0 %v1433
    %1455 = vmatprep.subr.bf16.mxu0 0
    %1456 = vmatpush1.bf16.msra.mxu0 %v1434
    %1457 = vmatprep.subr.bf16.mxu0 0
    %1458 = vmatpush1.bf16.msra.mxu0 %v1435
    %1459 = vmatprep.subr.bf16.mxu0 0
    %1460 = vmatpush1.bf16.msra.mxu0 %v1436
    %1461 = vmatprep.subr.bf16.mxu0 0
    %1462 = vmatpush1.bf16.msra.mxu0 0
    %1463 = vmatprep.subr.bf16.mxu0 0
    %1464 = vmatpush1.bf16.msra.mxu0 0
    %1465 = vmatprep.subr.bf16.mxu0 0
    %1466 = vmatpush1.bf16.msra.mxu0 0
    %1467 = vmatprep.subr.bf16.mxu0 0
    %1468 = vmatpush1.bf16.msra.mxu0 0
    %1469 = vmatprep.subr.bf16.mxu0 0
    %1470 = vmatpush1.bf16.msra.mxu0 0
    %1471 = vmatprep.subr.bf16.mxu0 0
    %1472 = vmatpush1.bf16.msra.mxu0 0
    %1473 = vmatprep.subr.bf16.mxu0 0
    %1474 = vmatpush1.bf16.msra.mxu0 0
    %1475 = vmatprep.subr.bf16.mxu0 0
    %1476 = vmatpush1.bf16.msra.mxu0 0
    %1477 = vmatprep.mubr.bf16.mxu0 0
    %1478 = vmatmul.mubr.bf16.gmra.mrb[0].mxu0 %v1373
    %v1479 = vpop.f32.mrb[0].mxu0
    %v1480 = vadd.f32 %v1395, %v1479
    %v1481 = vpop.f32.mrb[0].mxu0
    %v1482 = vpop.f32.mrb[0].mxu0
    %v1483 = vadd.f32 %v1395, %v1482
    %v1484 = vpop.f32.mrb[0].mxu0
    %1485 = vdwg.mxu0
    %v1486 = vlaneseq
    %v1487 = vand.u32 %v1486, 127
    %vm1488 = vcmp.lt.s32.totalorder %v1487, 10
    %v1489 = vsel %vm1488, %v1480, -inf
    %v1490 = vsel %vm1488, %v1483, -inf
    %1491 = vmax.xlane.f32.xlu0 %v1489
    %v1492 = vpop.xlane.xlu0 %1491
    %1493 = vmax.xlane.f32.xlu0 %v1490
    %v1494 = vpop.xlane.xlu0 %1493
    %v1495 = vsub.f32 %v1489, %v1492
    %v1496 = vsub.f32 %v1490, %v1494
    %v1497 = vmul.f32 %v1495, 1.442695
    %v1498 = vpow.pop %v1497
    %v1499 = vmul.f32 %v1496, 1.442695
    %v1500 = vpow.pop %v1499
    %1501 = vadd.xlane.f32.xlu0 %v1498
    %v1502 = vpop.xlane.xlu0 %1501
    %1503 = vadd.xlane.f32.xlu0 %v1500
    %v1504 = vpop.xlane.xlu0 %1503
    %v1505 = vrcp.pop %v1502
    %v1506 = vrcp.pop %v1504
    %v1507 = vmul.f32 %v1498, %v1505
    %v1508 = vmul.f32 %v1500, %v1506
    %1509 = vst [vmem:[#allocation13] sm:$0xff] %v1507
    %1510 = vst [vmem:[#allocation13 + $0x8] sm:$0xff] %v1508
    // Predicated region
    $region70: #{tpu_custom_call.1} parent=1 // pred_check
      _
    $region71: #{tpu_custom_call.1} parent=1 // pred_check_branch
      %1512 = sbr.rel (0) target = $region73
    $region72: #{tpu_custom_call.1} parent=1 // pred_region
      %s1514 = ssub.s32 256, 256
      %1515 = vsyncadd [#allocation4], %s1514
      %s1516 = sshll.u32 [#allocation13], 4
      %s1517 = int_to_ptr.vmem [resolvable:$true] %s1516
      %1522 = dma.vmem_to_hbm [thread:$0]  %s1517, 256, %s11, [#allocation4], 128, 128, 8
    $region73: #{tpu_custom_call.1} parent=1 // pred_fallthru
      _
    // Predicated region
    $region74: #{tpu_custom_call.1} parent=1 // pred_check
      _
    $region75: #{tpu_custom_call.1} parent=1 // pred_check_branch
      %1524 = sbr.rel (0) target = $region77
    $region76: #{tpu_custom_call.1} parent=1 // pred_region
      %1525 = dma.done [#allocation4], 256
    $region77: #{tpu_custom_call.1} parent=1 // pred_fallthru
      _
    %1526 = vsyncpa [#allocation3], 1
    %1527 = vsyncpa [#allocation6], 1
    %1528 = vsyncpa [#allocation9], 1
    %1529 = vsyncpa [#allocation12], 1
    %1530 = vsyncpa [#allocation4], 1

// kernel: tpu_custom_call.1
$region0: #{tpu_custom_call.1}
  #allocation0 [shape = 'u32[]', space=smem, size = 0x4, offset = 0x4, fixed_abs, tag = 'smem constant byte address 0x4 - core index']
  #allocation1 [shape = 'u32[144,128]{1,0:T(1,128)}', space=vmem, size = 0x12000, scoped, tag = 'internal scratch']
  %s0 = inlined_call_operand.hbm [shape: f32[8,784], index: 0, kind: input, shape index: {}]
  %s1 = inlined_call_operand.hbm [shape: bf16[784,256], index: 1, kind: input, shape index: {}]
  %s2 = inlined_call_operand.vmem [shape: f32[1,256], index: 2, kind: input, shape index: {}]
  %s3 = inlined_call_operand.hbm [shape: bf16[256,128], index: 3, kind: input, shape index: {}]
  %s4 = inlined_call_operand.vmem [shape: f32[1,128], index: 4, kind: input, shape index: {}]
  %s5 = inlined_call_operand.hbm [shape: bf16[128,128], index: 5, kind: input, shape index: {}]
  %s6 = inlined_call_operand.vmem [shape: f32[1,128], index: 6, kind: input, shape index: {}]
  %s7 = inlined_call_operand.hbm [shape: bf16[128,128], index: 7, kind: input, shape index: {}]
  %s8 = inlined_call_operand.vmem [shape: f32[1,128], index: 8, kind: input, shape index: {}]
  %s9 = inlined_call_operand.hbm [shape: bf16[128,128], index: 9, kind: input, shape index: {}]
  %s10 = inlined_call_operand.vmem [shape: f32[1,128], index: 10, kind: input, shape index: {}]
  %s11 = inlined_call_operand.hbm [shape: f32[16,128], index: 11, kind: output, shape index: {}]
  %s12 = sld [smem:[#allocation0]]
  $region78: #{tpu_custom_call.1} parent=0
    _
  %s14 = ssub.s32 1, %s12
  %s15 = scalar_select 0, %s14, %s12
  $region1: #{tpu_custom_call.1} parent=0
    #allocation2 [shape = 'u8[57344]{0}', space=vmem, size = 0xe000, scoped, tag = 'input window, operand 0, single buffered']
    #allocation3 [shape = 's32[1]{0}', space=sflag, size = 0x4, scoped, tag = 'scoped memory for tpu_custom_call.1']
    #allocation4 [shape = 's32[1]{0}', space=sflag, size = 0x4, scoped, tag = 'scoped memory for tpu_custom_call.1']
    #allocation5 [shape = 'u8[401408]{0}', space=vmem, size = 0x62000, scoped, tag = 'input window, operand 1, single buffered']
    #allocation6 [shape = 's32[1]{0}', space=sflag, size = 0x4, scoped, tag = 'scoped memory for tpu_custom_call.1']
    #allocation7 [shape = 'u8[65536]{0}', space=vmem, size = 0x10000, scoped, tag = 'input window, operand 3, single buffered']
    #allocation8 [shape = 'u8[32768]{0}', space=vmem, size = 0x8000, scoped, tag = 'input window, operand 5, single buffered']
    #allocation9 [shape = 's32[1]{0}', space=sflag, size = 0x4, scoped, tag = 'scoped memory for tpu_custom_call.1']
    #allocation10 [shape = 'u8[32768]{0}', space=vmem, size = 0x8000, scoped, tag = 'input window, operand 7, single buffered']
    #allocation11 [shape = 'u8[32768]{0}', space=vmem, size = 0x8000, scoped, tag = 'input window, operand 9, single buffered']
    #allocation12 [shape = 's32[1]{0}', space=sflag, size = 0x4, scoped, tag = 'scoped memory for tpu_custom_call.1']
    #allocation13 [shape = 'u8[8192]{0}', space=vmem, size = 0x2000, scoped, tag = 'output window, operand 0, single buffered']
    %16 = vsyncpa [#allocation3], 0
    %17 = vsyncpa [#allocation6], 0
    %18 = vsyncpa [#allocation9], 0
    %19 = vsyncpa [#allocation12], 0
    %20 = vsyncpa [#allocation4], 0
    // Predicated region
    $region2: #{tpu_custom_call.1} parent=1 // pred_check
      _
    $region3: #{tpu_custom_call.1} parent=1 // pred_check_branch
      %22 = sbr.rel (0) target = $region5
    $region4: #{tpu_custom_call.1} parent=1 // pred_region
      %s24 = ssub.s32 1792, 896
      %25 = vsyncadd [#allocation3], %s24
      %s26 = sshll.u32 [#allocation2], 4
      %s27 = int_to_ptr.vmem [resolvable:$true] %s26
      %32 = dma.hbm_to_vmem [thread:$0]  %s0, 896, %s27, [#allocation3], 896, 896, 56
    $region5: #{tpu_custom_call.1} parent=1 // pred_fallthru
      _
    // Predicated region
    $region6: #{tpu_custom_call.1} parent=1 // pred_check
      _
    $region7: #{tpu_custom_call.1} parent=1 // pred_check_branch
      %34 = sbr.rel (0) target = $region9
    $region8: #{tpu_custom_call.1} parent=1 // pred_region
      %s36 = ssub.s32 12544, 12544
      %37 = vsyncadd [#allocation6], %s36
      %s38 = sshll.u32 [#allocation5], 4
      %s39 = int_to_ptr.vmem [resolvable:$true] %s38
      %44 = dma.hbm_to_vmem [thread:$0]  %s1, 12544, %s39, [#allocation6], 128, 128, 8
    $region9: #{tpu_custom_call.1} parent=1 // pred_fallthru
      _
    // Predicated region
    $region10: #{tpu_custom_call.1} parent=1 // pred_check
      _
    $region11: #{tpu_custom_call.1} parent=1 // pred_check_branch
      %46 = sbr.rel (0) target = $region13
    $region12: #{tpu_custom_call.1} parent=1 // pred_region
      _
    $region13: #{tpu_custom_call.1} parent=1 // pred_fallthru
      _
    // Predicated region
    $region14: #{tpu_custom_call.1} parent=1 // pred_check
      _
    $region15: #{tpu_custom_call.1} parent=1 // pred_check_branch
      %48 = sbr.rel (0) target = $region17
    $region16: #{tpu_custom_call.1} parent=1 // pred_region
      %s50 = ssub.s32 2048, 2048
      %51 = vsyncadd [#allocation6], %s50
      %s52 = sshll.u32 [#allocation7], 4
      %s53 = int_to_ptr.vmem [resolvable:$true] %s52
      %58 = dma.hbm_to_vmem [thread:$0]  %s3, 2048, %s53, [#allocation6], 64, 64, 4
    $region17: #{tpu_custom_call.1} parent=1 // pred_fallthru
      _
    // Predicated region
    $region18: #{tpu_custom_call.1} parent=1 // pred_check
      _
    $region19: #{tpu_custom_call.1} parent=1 // pred_check_branch
      %60 = sbr.rel (0) target = $region21
    $region20: #{tpu_custom_call.1} parent=1 // pred_region
      _
    $region21: #{tpu_custom_call.1} parent=1 // pred_fallthru
      _
    // Predicated region
    $region22: #{tpu_custom_call.1} parent=1 // pred_check
      _
    $region23: #{tpu_custom_call.1} parent=1 // pred_check_branch
      %62 = sbr.rel (0) target = $region25
    $region24: #{tpu_custom_call.1} parent=1 // pred_region
      %s64 = ssub.s32 1024, 1024
      %65 = vsyncadd [#allocation9], %s64
      %s66 = sshll.u32 [#allocation8], 4
      %s67 = int_to_ptr.vmem [resolvable:$true] %s66
      %72 = dma.hbm_to_vmem [thread:$0]  %s5, 1024, %s67, [#allocation9], 64, 64, 4
    $region25: #{tpu_custom_call.1} parent=1 // pred_fallthru
      _
    // Predicated region
    $region26: #{tpu_custom_call.1} parent=1 // pred_check
      _
    $region27: #{tpu_custom_call.1} parent=1 // pred_check_branch
      %74 = sbr.rel (0) target = $region29
    $region28: #{tpu_custom_call.1} parent=1 // pred_region
      _
    $region29: #{tpu_custom_call.1} parent=1 // pred_fallthru
      _
    // Predicated region
    $region30: #{tpu_custom_call.1} parent=1 // pred_check
      _
    $region31: #{tpu_custom_call.1} parent=1 // pred_check_branch
      %76 = sbr.rel (0) target = $region33
    $region32: #{tpu_custom_call.1} parent=1 // pred_region
      %s78 = ssub.s32 1024, 1024
      %79 = vsyncadd [#allocation9], %s78
      %s80 = sshll.u32 [#allocation10], 4
      %s81 = int_to_ptr.vmem [resolvable:$true] %s80
      %86 = dma.hbm_to_vmem [thread:$0]  %s7, 1024, %s81, [#allocation9], 64, 64, 4
    $region33: #{tpu_custom_call.1} parent=1 // pred_fallthru
      _
    // Predicated region
    $region34: #{tpu_custom_call.1} parent=1 // pred_check
      _
    $region35: #{tpu_custom_call.1} parent=1 // pred_check_branch
      %88 = sbr.rel (0) target = $region37
    $region36: #{tpu_custom_call.1} parent=1 // pred_region
      _
    $region37: #{tpu_custom_call.1} parent=1 // pred_fallthru
      _
    // Predicated region
    $region38: #{tpu_custom_call.1} parent=1 // pred_check
      _
    $region39: #{tpu_custom_call.1} parent=1 // pred_check_branch
      %90 = sbr.rel (0) target = $region41
    $region40: #{tpu_custom_call.1} parent=1 // pred_region
      %s92 = ssub.s32 1024, 1024
      %93 = vsyncadd [#allocation12], %s92
      %s94 = sshll.u32 [#allocation11], 4
      %s95 = int_to_ptr.vmem [resolvable:$true] %s94
      %100 = dma.hbm_to_vmem [thread:$0]  %s9, 1024, %s95, [#allocation12], 64, 64, 4
    $region41: #{tpu_custom_call.1} parent=1 // pred_fallthru
      _
    // Predicated region
    $region42: #{tpu_custom_call.1} parent=1 // pred_check
      _
    $region43: #{tpu_custom_call.1} parent=1 // pred_check_branch
      %102 = sbr.rel (0) target = $region45
    $region44: #{tpu_custom_call.1} parent=1 // pred_region
      _
    $region45: #{tpu_custom_call.1} parent=1 // pred_fallthru
      _
    // Predicated region
    $region46: #{tpu_custom_call.1} parent=1 // pred_check
      _
    $region47: #{tpu_custom_call.1} parent=1 // pred_check_branch
      %104 = sbr.rel (0) target = $region49
    $region48: #{tpu_custom_call.1} parent=1 // pred_region
      %105 = dma.done [#allocation3], 1792
    $region49: #{tpu_custom_call.1} parent=1 // pred_fallthru
      _
    // Predicated region
    $region50: #{tpu_custom_call.1} parent=1 // pred_check
      _
    $region51: #{tpu_custom_call.1} parent=1 // pred_check_branch
      %107 = sbr.rel (0) target = $region53
    $region52: #{tpu_custom_call.1} parent=1 // pred_region
      %108 = dma.done [#allocation6], 12544
    $region53: #{tpu_custom_call.1} parent=1 // pred_fallthru
      _
    // Predicated region
    $region54: #{tpu_custom_call.1} parent=1 // pred_check
      _
    $region55: #{tpu_custom_call.1} parent=1 // pred_check_branch
      %110 = sbr.rel (0) target = $region57
    $region56: #{tpu_custom_call.1} parent=1 // pred_region
      %111 = dma.done [#allocation6], 2048
    $region57: #{tpu_custom_call.1} parent=1 // pred_fallthru
      _
    // Predicated region
    $region58: #{tpu_custom_call.1} parent=1 // pred_check
      _
    $region59: #{tpu_custom_call.1} parent=1 // pred_check_branch
      %113 = sbr.rel (0) target = $region61
    $region60: #{tpu_custom_call.1} parent=1 // pred_region
      %114 = dma.done [#allocation9], 1024
    $region61: #{tpu_custom_call.1} parent=1 // pred_fallthru
      _
    // Predicated region
    $region62: #{tpu_custom_call.1} parent=1 // pred_check
      _
    $region63: #{tpu_custom_call.1} parent=1 // pred_check_branch
      %116 = sbr.rel (0) target = $region65
    $region64: #{tpu_custom_call.1} parent=1 // pred_region
      %117 = dma.done [#allocation9], 1024
    $region65: #{tpu_custom_call.1} parent=1 // pred_fallthru
      _
    // Predicated region
    $region66: #{tpu_custom_call.1} parent=1 // pred_check
      _
    $region67: #{tpu_custom_call.1} parent=1 // pred_check_branch
      %119 = sbr.rel (0) target = $region69
    $region68: #{tpu_custom_call.1} parent=1 // pred_region
      %120 = dma.done [#allocation12], 1024
    $region69: #{tpu_custom_call.1} parent=1 // pred_fallthru
      _
    %v122 = vld [vmem:[#allocation2] sm:$0xff]
    %v123 = vld [vmem:[#allocation2 + $0x8] sm:$0xff]
    %v124 = vld [vmem:[#allocation2 + $0x10] sm:$0xff]
    %v125 = vld [vmem:[#allocation2 + $0x18] sm:$0xff]
    %v126 = vld [vmem:[#allocation2 + $0x20] sm:$0xff]
    %v127 = vld [vmem:[#allocation2 + $0x28] sm:$0xff]
    %v128 = vld [vmem:[#allocation2 + $0x30] sm:$0xff]
    %v129 = vld [vmem:[#allocation2 + $0x38] sm:$0xff]
    %v130 = vld [vmem:[#allocation2 + $0x40] sm:$0xff]
    %v131 = vld [vmem:[#allocation2 + $0x48] sm:$0xff]
    %v132 = vld [vmem:[#allocation2 + $0x50] sm:$0xff]
    %v133 = vld [vmem:[#allocation2 + $0x58] sm:$0xff]
    %v134 = vld [vmem:[#allocation2 + $0x60] sm:$0xff]
    %v135 = vld [vmem:[#allocation2 + $0x68] sm:$0xff]
    %v136 = vpack.c.bf16 %v129, %v122
    %v137 = vpack.c.bf16 %v130, %v123
    %v138 = vpack.c.bf16 %v131, %v124
    %v139 = vpack.c.bf16 %v132, %v125
    %v140 = vpack.c.bf16 %v133, %v126
    %v141 = vpack.c.bf16 %v134, %v127
    %v142 = vpack.c.bf16 %v135, %v128
    %v143 = vld [vmem:[#allocation5] sm:$0xff]
    %v144 = vld [vmem:[#allocation5 + $0x8] sm:$0xff]
    %v145 = vld [vmem:[#allocation5 + $0x10] sm:$0xff]
    %v146 = vld [vmem:[#allocation5 + $0x18] sm:$0xff]
    %v147 = vld [vmem:[#allocation5 + $0x20] sm:$0xff]
    %v148 = vld [vmem:[#allocation5 + $0x28] sm:$0xff]
    %v149 = vld [vmem:[#allocation5 + $0x30] sm:$0xff]
    %v150 = vld [vmem:[#allocation5 + $0x38] sm:$0xff]
    %v151 = vld [vmem:[#allocation5 + $0x40] sm:$0xff]
    %v152 = vld [vmem:[#allocation5 + $0x48] sm:$0xff]
    %v153 = vld [vmem:[#allocation5 + $0x50] sm:$0xff]
    %v154 = vld [vmem:[#allocation5 + $0x58] sm:$0xff]
    %v155 = vld [vmem:[#allocation5 + $0x60] sm:$0xff]
    %v156 = vld [vmem:[#allocation5 + $0x68] sm:$0xff]
    %v157 = vld [vmem:[#allocation5 + $0x70] sm:$0xff]
    %v158 = vld [vmem:[#allocation5 + $0x78] sm:$0xff]
    %v159 = vld [vmem:[#allocation5 + $0x80] sm:$0xff]
    %v160 = vld [vmem:[#allocation5 + $0x88] sm:$0xff]
    %v161 = vld [vmem:[#allocation5 + $0x90] sm:$0xff]
    %v162 = vld [vmem:[#allocation5 + $0x98] sm:$0xff]
    %v163 = vld [vmem:[#allocation5 + $0xa0] sm:$0xff]
    %v164 = vld [vmem:[#allocation5 + $0xa8] sm:$0xff]
    %v165 = vld [vmem:[#allocation5 + $0xb0] sm:$0xff]
    %v166 = vld [vmem:[#allocation5 + $0xb8] sm:$0xff]
    %v167 = vld [vmem:[#allocation5 + $0xc0] sm:$0xff]
    %v168 = vld [vmem:[#allocation5 + $0xc8] sm:$0xff]
    %v169 = vld [vmem:[#allocation5 + $0xd0] sm:$0xff]
    %v170 = vld [vmem:[#allocation5 + $0xd8] sm:$0xff]
    %v171 = vld [vmem:[#allocation5 + $0xe0] sm:$0xff]
    %v172 = vld [vmem:[#allocation5 + $0xe8] sm:$0xff]
    %v173 = vld [vmem:[#allocation5 + $0xf0] sm:$0xff]
    %v174 = vld [vmem:[#allocation5 + $0xf8] sm:$0xff]
    %v175 = vld [vmem:[#allocation5 + $0x100] sm:$0xff]
    %v176 = vld [vmem:[#allocation5 + $0x108] sm:$0xff]
    %v177 = vld [vmem:[#allocation5 + $0x110] sm:$0xff]
    %v178 = vld [vmem:[#allocation5 + $0x118] sm:$0xff]
    %v179 = vld [vmem:[#allocation5 + $0x120] sm:$0xff]
    %v180 = vld [vmem:[#allocation5 + $0x128] sm:$0xff]
    %v181 = vld [vmem:[#allocation5 + $0x130] sm:$0xff]
    %v182 = vld [vmem:[#allocation5 + $0x138] sm:$0xff]
    %v183 = vld [vmem:[#allocation5 + $0x140] sm:$0xff]
    %v184 = vld [vmem:[#allocation5 + $0x148] sm:$0xff]
    %v185 = vld [vmem:[#allocation5 + $0x150] sm:$0xff]
    %v186 = vld [vmem:[#allocation5 + $0x158] sm:$0xff]
    %v187 = vld [vmem:[#allocation5 + $0x160] sm:$0xff]
    %v188 = vld [vmem:[#allocation5 + $0x168] sm:$0xff]
    %v189 = vld [vmem:[#allocation5 + $0x170] sm:$0xff]
    %v190 = vld [vmem:[#allocation5 + $0x178] sm:$0xff]
    %v191 = vld [vmem:[#allocation5 + $0x180] sm:$0xff]
    %v192 = vld [vmem:[#allocation5 + $0x188] sm:$0xff]
    %v193 = vld [vmem:[#allocation5 + $0x190] sm:$0xff]
    %v194 = vld [vmem:[#allocation5 + $0x198] sm:$0xff]
    %v195 = vld [vmem:[#allocation5 + $0x1a0] sm:$0xff]
    %v196 = vld [vmem:[#allocation5 + $0x1a8] sm:$0xff]
    %v197 = vld [vmem:[#allocation5 + $0x1b0] sm:$0xff]
    %v198 = vld [vmem:[#allocation5 + $0x1b8] sm:$0xff]
    %v199 = vld [vmem:[#allocation5 + $0x1c0] sm:$0xff]
    %v200 = vld [vmem:[#allocation5 + $0x1c8] sm:$0xff]
    %v201 = vld [vmem:[#allocation5 + $0x1d0] sm:$0xff]
    %v202 = vld [vmem:[#allocation5 + $0x1d8] sm:$0xff]
    %v203 = vld [vmem:[#allocation5 + $0x1e0] sm:$0xff]
    %v204 = vld [vmem:[#allocation5 + $0x1e8] sm:$0xff]
    %v205 = vld [vmem:[#allocation5 + $0x1f0] sm:$0xff]
    %v206 = vld [vmem:[#allocation5 + $0x1f8] sm:$0xff]
    %v207 = vld [vmem:[#allocation5 + $0x200] sm:$0xff]
    %v208 = vld [vmem:[#allocation5 + $0x208] sm:$0xff]
    %v209 = vld [vmem:[#allocation5 + $0x210] sm:$0xff]
    %v210 = vld [vmem:[#allocation5 + $0x218] sm:$0xff]
    %v211 = vld [vmem:[#allocation5 + $0x220] sm:$0xff]
    %v212 = vld [vmem:[#allocation5 + $0x228] sm:$0xff]
    %v213 = vld [vmem:[#allocation5 + $0x230] sm:$0xff]
    %v214 = vld [vmem:[#allocation5 + $0x238] sm:$0xff]
    %v215 = vld [vmem:[#allocation5 + $0x240] sm:$0xff]
    %v216 = vld [vmem:[#allocation5 + $0x248] sm:$0xff]
    %v217 = vld [vmem:[#allocation5 + $0x250] sm:$0xff]
    %v218 = vld [vmem:[#allocation5 + $0x258] sm:$0xff]
    %v219 = vld [vmem:[#allocation5 + $0x260] sm:$0xff]
    %v220 = vld [vmem:[#allocation5 + $0x268] sm:$0xff]
    %v221 = vld [vmem:[#allocation5 + $0x270] sm:$0xff]
    %v222 = vld [vmem:[#allocation5 + $0x278] sm:$0xff]
    %v223 = vld [vmem:[#allocation5 + $0x280] sm:$0xff]
    %v224 = vld [vmem:[#allocation5 + $0x288] sm:$0xff]
    %v225 = vld [vmem:[#allocation5 + $0x290] sm:$0xff]
    %v226 = vld [vmem:[#allocation5 + $0x298] sm:$0xff]
    %v227 = vld [vmem:[#allocation5 + $0x2a0] sm:$0xff]
    %v228 = vld [vmem:[#allocation5 + $0x2a8] sm:$0xff]
    %v229 = vld [vmem:[#allocation5 + $0x2b0] sm:$0xff]
    %v230 = vld [vmem:[#allocation5 + $0x2b8] sm:$0xff]
    %v231 = vld [vmem:[#allocation5 + $0x2c0] sm:$0xff]
    %v232 = vld [vmem:[#allocation5 + $0x2c8] sm:$0xff]
    %v233 = vld [vmem:[#allocation5 + $0x2d0] sm:$0xff]
    %v234 = vld [vmem:[#allocation5 + $0x2d8] sm:$0xff]
    %v235 = vld [vmem:[#allocation5 + $0x2e0] sm:$0xff]
    %v236 = vld [vmem:[#allocation5 + $0x2e8] sm:$0xff]
    %v237 = vld [vmem:[#allocation5 + $0x2f0] sm:$0xff]
    %v238 = vld [vmem:[#allocation5 + $0x2f8] sm:$0xff]
    %v239 = vld [vmem:[#allocation5 + $0x300] sm:$0xff]
    %v240 = vld [vmem:[#allocation5 + $0x308] sm:$0xff]
    %v241 = vld [vmem:[%s2] sm:$0x3]
    %v243 = vlaneseq
    %v244 = vshrl.u32 %v243, 7
    %v245 = vsub.s32 0, %v244
    %v246 = vrot.slane %v241, %v245
    %v247 = vlaneseq
    %v248 = vshrl.u32 %v247, 7
    %v249 = vsub.s32 1, %v248
    %v250 = vrot.slane %v241, %v249
    %v351 = vunpack.c.l.b16 %v143
    %v352 = vunpack.c.h.b16 %v143
    %v353 = vunpack.c.l.b16 %v144
    %v354 = vunpack.c.h.b16 %v144
    %v355 = vunpack.c.l.b16 %v145
    %v356 = vunpack.c.h.b16 %v145
    %v357 = vunpack.c.l.b16 %v146
    %v358 = vunpack.c.h.b16 %v146
    %v359 = vunpack.c.l.b16 %v147
    %v360 = vunpack.c.h.b16 %v147
    %v361 = vunpack.c.l.b16 %v148
    %v362 = vunpack.c.h.b16 %v148
    %v363 = vunpack.c.l.b16 %v149
    %v364 = vunpack.c.h.b16 %v149
    %v365 = vunpack.c.l.b16 %v150
    %v366 = vunpack.c.h.b16 %v150
    %v367 = vunpack.c.l.b16 %v151
    %v368 = vunpack.c.h.b16 %v151
    %v369 = vunpack.c.l.b16 %v152
    %v370 = vunpack.c.h.b16 %v152
    %v371 = vunpack.c.l.b16 %v153
    %v372 = vunpack.c.h.b16 %v153
    %v373 = vunpack.c.l.b16 %v154
    %v374 = vunpack.c.h.b16 %v154
    %v375 = vunpack.c.l.b16 %v155
    %v376 = vunpack.c.h.b16 %v155
    %v377 = vunpack.c.l.b16 %v156
    %v378 = vunpack.c.h.b16 %v156
    %v379 = vunpack.c.l.b16 %v157
    %v380 = vunpack.c.h.b16 %v157
    %v381 = vunpack.c.l.b16 %v158
    %v382 = vunpack.c.h.b16 %v158
    %v383 = vunpack.c.l.b16 %v159
    %v384 = vunpack.c.h.b16 %v159
    %v385 = vunpack.c.l.b16 %v160
    %v386 = vunpack.c.h.b16 %v160
    %v387 = vunpack.c.l.b16 %v161
    %v388 = vunpack.c.h.b16 %v161
    %v389 = vunpack.c.l.b16 %v162
    %v390 = vunpack.c.h.b16 %v162
    %v391 = vunpack.c.l.b16 %v163
    %v392 = vunpack.c.h.b16 %v163
    %v393 = vunpack.c.l.b16 %v164
    %v394 = vunpack.c.h.b16 %v164
    %v395 = vunpack.c.l.b16 %v165
    %v396 = vunpack.c.h.b16 %v165
    %v397 = vunpack.c.l.b16 %v166
    %v398 = vunpack.c.h.b16 %v166
    %v399 = vunpack.c.l.b16 %v167
    %v400 = vunpack.c.h.b16 %v167
    %v401 = vunpack.c.l.b16 %v168
    %v402 = vunpack.c.h.b16 %v168
    %v403 = vunpack.c.l.b16 %v169
    %v404 = vunpack.c.h.b16 %v169
    %v405 = vunpack.c.l.b16 %v170
    %v406 = vunpack.c.h.b16 %v170
    %v407 = vunpack.c.l.b16 %v171
    %v408 = vunpack.c.h.b16 %v171
    %v409 = vunpack.c.l.b16 %v172
    %v410 = vunpack.c.h.b16 %v172
    %v411 = vunpack.c.l.b16 %v173
    %v412 = vunpack.c.h.b16 %v173
    %v413 = vunpack.c.l.b16 %v174
    %v414 = vunpack.c.h.b16 %v174
    %v415 = vunpack.c.l.b16 %v175
    %v416 = vunpack.c.h.b16 %v175
    %v417 = vunpack.c.l.b16 %v176
    %v418 = vunpack.c.h.b16 %v176
    %v419 = vunpack.c.l.b16 %v177
    %v420 = vunpack.c.h.b16 %v177
    %v421 = vunpack.c.l.b16 %v178
    %v422 = vunpack.c.h.b16 %v178
    %v423 = vunpack.c.l.b16 %v179
    %v424 = vunpack.c.h.b16 %v179
    %v425 = vunpack.c.l.b16 %v180
    %v426 = vunpack.c.h.b16 %v180
    %v427 = vunpack.c.l.b16 %v181
    %v428 = vunpack.c.h.b16 %v181
    %v429 = vunpack.c.l.b16 %v182
    %v430 = vunpack.c.h.b16 %v182
    %v431 = vunpack.c.l.b16 %v183
    %v432 = vunpack.c.h.b16 %v183
    %v433 = vunpack.c.l.b16 %v184
    %v434 = vunpack.c.h.b16 %v184
    %v435 = vunpack.c.l.b16 %v185
    %v436 = vunpack.c.h.b16 %v185
    %v437 = vunpack.c.l.b16 %v186
    %v438 = vunpack.c.h.b16 %v186
    %v439 = vunpack.c.l.b16 %v187
    %v440 = vunpack.c.h.b16 %v187
    %v441 = vunpack.c.l.b16 %v188
    %v442 = vunpack.c.h.b16 %v188
    %v443 = vunpack.c.l.b16 %v189
    %v444 = vunpack.c.h.b16 %v189
    %v445 = vunpack.c.l.b16 %v190
    %v446 = vunpack.c.h.b16 %v190
    %v447 = vunpack.c.l.b16 %v191
    %v448 = vunpack.c.h.b16 %v191
    %v449 = vunpack.c.l.b16 %v192
    %v450 = vunpack.c.h.b16 %v192
    %v451 = vunpack.c.l.b16 %v193
    %v452 = vunpack.c.h.b16 %v193
    %v453 = vunpack.c.l.b16 %v194
    %v454 = vunpack.c.h.b16 %v194
    %v455 = vunpack.c.l.b16 %v195
    %v456 = vunpack.c.h.b16 %v195
    %v457 = vunpack.c.l.b16 %v196
    %v458 = vunpack.c.h.b16 %v196
    %v459 = vunpack.c.l.b16 %v197
    %v460 = vunpack.c.h.b16 %v197
    %v461 = vunpack.c.l.b16 %v198
    %v462 = vunpack.c.h.b16 %v198
    %v463 = vunpack.c.l.b16 %v199
    %v464 = vunpack.c.h.b16 %v199
    %v465 = vunpack.c.l.b16 %v200
    %v466 = vunpack.c.h.b16 %v200
    %v467 = vunpack.c.l.b16 %v201
    %v468 = vunpack.c.h.b16 %v201
    %v469 = vunpack.c.l.b16 %v202
    %v470 = vunpack.c.h.b16 %v202
    %v471 = vunpack.c.l.b16 %v203
    %v472 = vunpack.c.h.b16 %v203
    %v473 = vunpack.c.l.b16 %v204
    %v474 = vunpack.c.h.b16 %v204
    %v475 = vunpack.c.l.b16 %v205
    %v476 = vunpack.c.h.b16 %v205
    %v477 = vunpack.c.l.b16 %v206
    %v478 = vunpack.c.h.b16 %v206
    %v479 = vunpack.c.l.b16 %v207
    %v480 = vunpack.c.h.b16 %v207
    %v481 = vunpack.c.l.b16 %v208
    %v482 = vunpack.c.h.b16 %v208
    %v483 = vunpack.c.l.b16 %v209
    %v484 = vunpack.c.h.b16 %v209
    %v485 = vunpack.c.l.b16 %v210
    %v486 = vunpack.c.h.b16 %v210
    %v487 = vunpack.c.l.b16 %v211
    %v488 = vunpack.c.h.b16 %v211
    %v489 = vunpack.c.l.b16 %v212
    %v490 = vunpack.c.h.b16 %v212
    %v491 = vunpack.c.l.b16 %v213
    %v492 = vunpack.c.h.b16 %v213
    %v493 = vunpack.c.l.b16 %v214
    %v494 = vunpack.c.h.b16 %v214
    %v495 = vunpack.c.l.b16 %v215
    %v496 = vunpack.c.h.b16 %v215
    %v497 = vunpack.c.l.b16 %v216
    %v498 = vunpack.c.h.b16 %v216
    %v499 = vunpack.c.l.b16 %v217
    %v500 = vunpack.c.h.b16 %v217
    %v501 = vunpack.c.l.b16 %v218
    %v502 = vunpack.c.h.b16 %v218
    %v503 = vunpack.c.l.b16 %v219
    %v504 = vunpack.c.h.b16 %v219
    %v505 = vunpack.c.l.b16 %v220
    %v506 = vunpack.c.h.b16 %v220
    %v507 = vunpack.c.l.b16 %v221
    %v508 = vunpack.c.h.b16 %v221
    %v509 = vunpack.c.l.b16 %v222
    %v510 = vunpack.c.h.b16 %v222
    %v511 = vunpack.c.l.b16 %v223
    %v512 = vunpack.c.h.b16 %v223
    %v513 = vunpack.c.l.b16 %v224
    %v514 = vunpack.c.h.b16 %v224
    %v515 = vunpack.c.l.b16 %v225
    %v516 = vunpack.c.h.b16 %v225
    %v517 = vunpack.c.l.b16 %v226
    %v518 = vunpack.c.h.b16 %v226
    %v519 = vunpack.c.l.b16 %v227
    %v520 = vunpack.c.h.b16 %v227
    %v521 = vunpack.c.l.b16 %v228
    %v522 = vunpack.c.h.b16 %v228
    %v523 = vunpack.c.l.b16 %v229
    %v524 = vunpack.c.h.b16 %v229
    %v525 = vunpack.c.l.b16 %v230
    %v526 = vunpack.c.h.b16 %v230
    %v527 = vunpack.c.l.b16 %v231
    %v528 = vunpack.c.h.b16 %v231
    %v529 = vunpack.c.l.b16 %v232
    %v530 = vunpack.c.h.b16 %v232
    %v531 = vunpack.c.l.b16 %v233
    %v532 = vunpack.c.h.b16 %v233
    %v533 = vunpack.c.l.b16 %v234
    %v534 = vunpack.c.h.b16 %v234
    %v535 = vunpack.c.l.b16 %v235
    %v536 = vunpack.c.h.b16 %v235
    %v537 = vunpack.c.l.b16 %v236
    %v538 = vunpack.c.h.b16 %v236
    %v539 = vunpack.c.l.b16 %v237
    %v540 = vunpack.c.h.b16 %v237
    %v541 = vunpack.c.l.b16 %v238
    %v542 = vunpack.c.h.b16 %v238
    %v543 = vunpack.c.l.b16 %v239
    %v544 = vunpack.c.h.b16 %v239
    %v545 = vunpack.c.l.b16 %v240
    %v546 = vunpack.c.h.b16 %v240
    %v547 = vpack.c.b16 %v353, %v351
    %v548 = vpack.c.b16 %v354, %v352
    %v549 = vpack.c.b16 %v357, %v355
    %v550 = vpack.c.b16 %v358, %v356
    %v551 = vpack.c.b16 %v361, %v359
    %v552 = vpack.c.b16 %v362, %v360
    %v553 = vpack.c.b16 %v365, %v363
    %v554 = vpack.c.b16 %v366, %v364
    %v555 = vpack.c.b16 %v369, %v367
    %v556 = vpack.c.b16 %v370, %v368
    %v557 = vpack.c.b16 %v373, %v371
    %v558 = vpack.c.b16 %v374, %v372
    %v559 = vpack.c.b16 %v377, %v375
    %v560 = vpack.c.b16 %v378, %v376
    %v561 = vpack.c.b16 %v381, %v379
    %v562 = vpack.c.b16 %v382, %v380
    %v563 = vpack.c.b16 %v385, %v383
    %v564 = vpack.c.b16 %v386, %v384
    %v565 = vpack.c.b16 %v389, %v387
    %v566 = vpack.c.b16 %v390, %v388
    %v567 = vpack.c.b16 %v393, %v391
    %v568 = vpack.c.b16 %v394, %v392
    %v569 = vpack.c.b16 %v397, %v395
    %v570 = vpack.c.b16 %v398, %v396
    %v571 = vpack.c.b16 %v401, %v399
    %v572 = vpack.c.b16 %v402, %v400
    %v573 = vpack.c.b16 %v405, %v403
    %v574 = vpack.c.b16 %v406, %v404
    %v575 = vpack.c.b16 %v409, %v407
    %v576 = vpack.c.b16 %v410, %v408
    %v577 = vpack.c.b16 %v413, %v411
    %v578 = vpack.c.b16 %v414, %v412
    %v579 = vpack.c.b16 %v417, %v415
    %v580 = vpack.c.b16 %v418, %v416
    %v581 = vpack.c.b16 %v421, %v419
    %v582 = vpack.c.b16 %v422, %v420
    %v583 = vpack.c.b16 %v425, %v423
    %v584 = vpack.c.b16 %v426, %v424
    %v585 = vpack.c.b16 %v429, %v427
    %v586 = vpack.c.b16 %v430, %v428
    %v587 = vpack.c.b16 %v433, %v431
    %v588 = vpack.c.b16 %v434, %v432
    %v589 = vpack.c.b16 %v437, %v435
    %v590 = vpack.c.b16 %v438, %v436
    %v591 = vpack.c.b16 %v441, %v439
    %v592 = vpack.c.b16 %v442, %v440
    %v593 = vpack.c.b16 %v445, %v443
    %v594 = vpack.c.b16 %v446, %v444
    %v595 = vpack.c.b16 %v449, %v447
    %v596 = vpack.c.b16 %v450, %v448
    %v597 = vpack.c.b16 %v453, %v451
    %v598 = vpack.c.b16 %v454, %v452
    %v599 = vpack.c.b16 %v457, %v455
    %v600 = vpack.c.b16 %v458, %v456
    %v601 = vpack.c.b16 %v461, %v459
    %v602 = vpack.c.b16 %v462, %v460
    %v603 = vpack.c.b16 %v465, %v463
    %v604 = vpack.c.b16 %v466, %v464
    %v605 = vpack.c.b16 %v469, %v467
    %v606 = vpack.c.b16 %v470, %v468
    %v607 = vpack.c.b16 %v473, %v471
    %v608 = vpack.c.b16 %v474, %v472
    %v609 = vpack.c.b16 %v477, %v475
    %v610 = vpack.c.b16 %v478, %v476
    %v611 = vpack.c.b16 %v481, %v479
    %v612 = vpack.c.b16 %v482, %v480
    %v613 = vpack.c.b16 %v485, %v483
    %v614 = vpack.c.b16 %v486, %v484
    %v615 = vpack.c.b16 %v489, %v487
    %v616 = vpack.c.b16 %v490, %v488
    %v617 = vpack.c.b16 %v493, %v491
    %v618 = vpack.c.b16 %v494, %v492
    %v619 = vpack.c.b16 %v497, %v495
    %v620 = vpack.c.b16 %v498, %v496
    %v621 = vpack.c.b16 %v501, %v499
    %v622 = vpack.c.b16 %v502, %v500
    %v623 = vpack.c.b16 %v505, %v503
    %v624 = vpack.c.b16 %v506, %v504
    %v625 = vpack.c.b16 %v509, %v507
    %v626 = vpack.c.b16 %v510, %v508
    %v627 = vpack.c.b16 %v513, %v511
    %v628 = vpack.c.b16 %v514, %v512
    %v629 = vpack.c.b16 %v517, %v515
    %v630 = vpack.c.b16 %v518, %v516
    %v631 = vpack.c.b16 %v521, %v519
    %v632 = vpack.c.b16 %v522, %v520
    %v633 = vpack.c.b16 %v525, %v523
    %v634 = vpack.c.b16 %v526, %v524
    %v635 = vpack.c.b16 %v529, %v527
    %v636 = vpack.c.b16 %v530, %v528
    %v637 = vpack.c.b16 %v533, %v531
    %v638 = vpack.c.b16 %v534, %v532
    %v639 = vpack.c.b16 %v537, %v535
    %v640 = vpack.c.b16 %v538, %v536
    %v641 = vpack.c.b16 %v541, %v539
    %v642 = vpack.c.b16 %v542, %v540
    %v643 = vpack.c.b16 %v545, %v543
    %v644 = vpack.c.b16 %v546, %v544
    %vm743 = vcmask 130048
    %v745 = vsel %vm743, %v142, 0
    %747 = vmatprep.subr.bf16.mxu0 %v548
    %748 = vmatpush1.bf16.msra.mxu0 %v547
    %749 = vmatprep.subr.bf16.mxu0 %v550
    %750 = vmatpush1.bf16.msra.mxu0 %v549
    %751 = vmatprep.subr.bf16.mxu0 %v552
    %752 = vmatpush1.bf16.msra.mxu0 %v551
    %753 = vmatprep.subr.bf16.mxu0 %v554
    %754 = vmatpush1.bf16.msra.mxu0 %v553
    %755 = vmatprep.subr.bf16.mxu0 %v556
    %756 = vmatpush1.bf16.msra.mxu0 %v555
    %757 = vmatprep.subr.bf16.mxu0 %v558
    %758 = vmatpush1.bf16.msra.mxu0 %v557
    %759 = vmatprep.subr.bf16.mxu0 %v560
    %760 = vmatpush1.bf16.msra.mxu0 %v559
    %761 = vmatprep.subr.bf16.mxu0 %v562
    %762 = vmatpush1.bf16.msra.mxu0 %v561
    %763 = vmatprep.subr.bf16.mxu0 %v564
    %764 = vmatpush1.bf16.msra.mxu0 %v563
    %765 = vmatprep.subr.bf16.mxu0 %v566
    %766 = vmatpush1.bf16.msra.mxu0 %v565
    %767 = vmatprep.subr.bf16.mxu0 %v568
    %768 = vmatpush1.bf16.msra.mxu0 %v567
    %769 = vmatprep.subr.bf16.mxu0 %v570
    %770 = vmatpush1.bf16.msra.mxu0 %v569
    %771 = vmatprep.subr.bf16.mxu0 %v572
    %772 = vmatpush1.bf16.msra.mxu0 %v571
    %773 = vmatprep.subr.bf16.mxu0 %v574
    %774 = vmatpush1.bf16.msra.mxu0 %v573
    %775 = vmatprep.subr.bf16.mxu0 %v576
    %776 = vmatpush1.bf16.msra.mxu0 %v575
    %777 = vmatprep.subr.bf16.mxu0 %v578
    %778 = vmatpush1.bf16.msra.mxu0 %v577
    %779 = vmatprep.mubr.bf16.mxu0 %v137
    %780 = vmatmul.mubr.bf16.gmra.mrb[0].mxu0 %v136
    %v781 = vpop.f32.mrb[0].mxu0
    %v782 = vadd.f32 %v246, %v781
    %v783 = vpop.f32.mrb[0].mxu0
    %v784 = vadd.f32 %v250, %v783
    %v785 = vpop.f32.mrb[0].mxu0
    %v786 = vadd.f32 %v246, %v785
    %v787 = vpop.f32.mrb[0].mxu0
    %v788 = vadd.f32 %v250, %v787
    %789 = vdwg.mxu0
    %790 = vmatprep.subr.bf16.mxu0 %v580
    %791 = vmatpush1.bf16.msra.mxu0 %v579
    %792 = vmatprep.subr.bf16.mxu0 %v582
    %793 = vmatpush1.bf16.msra.mxu0 %v581
    %794 = vmatprep.subr.bf16.mxu0 %v584
    %795 = vmatpush1.bf16.msra.mxu0 %v583
    %796 = vmatprep.subr.bf16.mxu0 %v586
    %797 = vmatpush1.bf16.msra.mxu0 %v585
    %798 = vmatprep.subr.bf16.mxu0 %v588
    %799 = vmatpush1.bf16.msra.mxu0 %v587
    %800 = vmatprep.subr.bf16.mxu0 %v590
    %801 = vmatpush1.bf16.msra.mxu0 %v589
    %802 = vmatprep.subr.bf16.mxu0 %v592
    %803 = vmatpush1.bf16.msra.mxu0 %v591
    %804 = vmatprep.subr.bf16.mxu0 %v594
    %805 = vmatpush1.bf16.msra.mxu0 %v593
    %806 = vmatprep.subr.bf16.mxu0 %v596
    %807 = vmatpush1.bf16.msra.mxu0 %v595
    %808 = vmatprep.subr.bf16.mxu0 %v598
    %809 = vmatpush1.bf16.msra.mxu0 %v597
    %810 = vmatprep.subr.bf16.mxu0 %v600
    %811 = vmatpush1.bf16.msra.mxu0 %v599
    %812 = vmatprep.subr.bf16.mxu0 %v602
    %813 = vmatpush1.bf16.msra.mxu0 %v601
    %814 = vmatprep.subr.bf16.mxu0 %v604
    %815 = vmatpush1.bf16.msra.mxu0 %v603
    %816 = vmatprep.subr.bf16.mxu0 %v606
    %817 = vmatpush1.bf16.msra.mxu0 %v605
    %818 = vmatprep.subr.bf16.mxu0 %v608
    %819 = vmatpush1.bf16.msra.mxu0 %v607
    %820 = vmatprep.subr.bf16.mxu0 %v610
    %821 = vmatpush1.bf16.msra.mxu0 %v609
    %822 = vmatprep.mubr.bf16.mxu0 %v139
    %823 = vmatmul.mubr.bf16.gmra.mrb[0].mxu0 %v138
    %v824 = vpop.f32.mrb[0].mxu0
    %v825 = vadd.f32 %v782, %v824
    %v826 = vpop.f32.mrb[0].mxu0
    %v827 = vadd.f32 %v784, %v826
    %v828 = vpop.f32.mrb[0].mxu0
    %v829 = vadd.f32 %v786, %v828
    %v830 = vpop.f32.mrb[0].mxu0
    %v831 = vadd.f32 %v788, %v830
    %832 = vdwg.mxu0
    %833 = vmatprep.subr.bf16.mxu0 %v612
    %834 = vmatpush1.bf16.msra.mxu0 %v611
    %835 = vmatprep.subr.bf16.mxu0 %v614
    %836 = vmatpush1.bf16.msra.mxu0 %v613
    %837 = vmatprep.subr.bf16.mxu0 %v616
    %838 = vmatpush1.bf16.msra.mxu0 %v615
    %839 = vmatprep.subr.bf16.mxu0 %v618
    %840 = vmatpush1.bf16.msra.mxu0 %v617
    %841 = vmatprep.subr.bf16.mxu0 %v620
    %842 = vmatpush1.bf16.msra.mxu0 %v619
    %843 = vmatprep.subr.bf16.mxu0 %v622
    %844 = vmatpush1.bf16.msra.mxu0 %v621
    %845 = vmatprep.subr.bf16.mxu0 %v624
    %846 = vmatpush1.bf16.msra.mxu0 %v623
    %847 = vmatprep.subr.bf16.mxu0 %v626
    %848 = vmatpush1.bf16.msra.mxu0 %v625
    %849 = vmatprep.subr.bf16.mxu0 %v628
    %850 = vmatpush1.bf16.msra.mxu0 %v627
    %851 = vmatprep.subr.bf16.mxu0 %v630
    %852 = vmatpush1.bf16.msra.mxu0 %v629
    %853 = vmatprep.subr.bf16.mxu0 %v632
    %854 = vmatpush1.bf16.msra.mxu0 %v631
    %855 = vmatprep.subr.bf16.mxu0 %v634
    %856 = vmatpush1.bf16.msra.mxu0 %v633
    %857 = vmatprep.subr.bf16.mxu0 %v636
    %858 = vmatpush1.bf16.msra.mxu0 %v635
    %859 = vmatprep.subr.bf16.mxu0 %v638
    %860 = vmatpush1.bf16.msra.mxu0 %v637
    %861 = vmatprep.subr.bf16.mxu0 %v640
    %862 = vmatpush1.bf16.msra.mxu0 %v639
    %863 = vmatprep.subr.bf16.mxu0 %v642
    %864 = vmatpush1.bf16.msra.mxu0 %v641
    %865 = vmatprep.mubr.bf16.mxu0 %v141
    %866 = vmatmul.mubr.bf16.gmra.mrb[0].mxu0 %v140
    %v867 = vpop.f32.mrb[0].mxu0
    %v868 = vadd.f32 %v825, %v867
    %v869 = vpop.f32.mrb[0].mxu0
    %v870 = vadd.f32 %v827, %v869
    %v871 = vpop.f32.mrb[0].mxu0
    %v872 = vadd.f32 %v829, %v871
    %v873 = vpop.f32.mrb[0].mxu0
    %v874 = vadd.f32 %v831, %v873
    %875 = vdwg.mxu0
    %876 = vmatprep.subr.bf16.mxu0 %v644
    %877 = vmatpush1.bf16.msra.mxu0 %v643
    %878 = vmatprep.subr.bf16.mxu0 0
    %879 = vmatpush1.bf16.msra.mxu0 0
    %880 = vmatprep.subr.bf16.mxu0 0
    %881 = vmatpush1.bf16.msra.mxu0 0
    %882 = vmatprep.subr.bf16.mxu0 0
    %883 = vmatpush1.bf16.msra.mxu0 0
    %884 = vmatprep.subr.bf16.mxu0 0
    %885 = vmatpush1.bf16.msra.mxu0 0
    %886 = vmatprep.subr.bf16.mxu0 0
    %887 = vmatpush1.bf16.msra.mxu0 0
    %888 = vmatprep.subr.bf16.mxu0 0
    %889 = vmatpush1.bf16.msra.mxu0 0
    %890 = vmatprep.subr.bf16.mxu0 0
    %891 = vmatpush1.bf16.msra.mxu0 0
    %892 = vmatprep.subr.bf16.mxu0 0
    %893 = vmatpush1.bf16.msra.mxu0 0
    %894 = vmatprep.subr.bf16.mxu0 0
    %895 = vmatpush1.bf16.msra.mxu0 0
    %896 = vmatprep.subr.bf16.mxu0 0
    %897 = vmatpush1.bf16.msra.mxu0 0
    %898 = vmatprep.subr.bf16.mxu0 0
    %899 = vmatpush1.bf16.msra.mxu0 0
    %900 = vmatprep.subr.bf16.mxu0 0
    %901 = vmatpush1.bf16.msra.mxu0 0
    %902 = vmatprep.subr.bf16.mxu0 0
    %903 = vmatpush1.bf16.msra.mxu0 0
    %904 = vmatprep.subr.bf16.mxu0 0
    %905 = vmatpush1.bf16.msra.mxu0 0
    %906 = vmatprep.subr.bf16.mxu0 0
    %907 = vmatpush1.bf16.msra.mxu0 0
    %908 = vmatprep.mubr.bf16.mxu0 0
    %909 = vmatmul.mubr.bf16.gmra.mrb[0].mxu0 %v745
    %v910 = vpop.f32.mrb[0].mxu0
    %v911 = vadd.f32 %v868, %v910
    %v912 = vpop.f32.mrb[0].mxu0
    %v913 = vadd.f32 %v870, %v912
    %v914 = vpop.f32.mrb[0].mxu0
    %v915 = vadd.f32 %v872, %v914
    %v916 = vpop.f32.mrb[0].mxu0
    %v917 = vadd.f32 %v874, %v916
    %918 = vdwg.mxu0
    %v919 = vsub.f32 0.0, %v911
    %v920 = vsub.f32 0.0, %v913
    %v921 = vsub.f32 0.0, %v915
    %v922 = vsub.f32 0.0, %v917
    %v923 = vmul.f32 %v919, 1.442695
    %v924 = vpow.pop %v923
    %v925 = vmul.f32 %v920, 1.442695
    %v926 = vpow.pop %v925
    %v927 = vmul.f32 %v921, 1.442695
    %v928 = vpow.pop %v927
    %v929 = vmul.f32 %v922, 1.442695
    %v930 = vpow.pop %v929
    %v931 = vadd.f32 %v924, 1.0
    %v932 = vadd.f32 %v926, 1.0
    %v933 = vadd.f32 %v928, 1.0
    %v934 = vadd.f32 %v930, 1.0
    %v935 = vrcp.pop %v931
    %v936 = vrcp.pop %v932
    %v937 = vrcp.pop %v933
    %v938 = vrcp.pop %v934
    %v939 = vpack.c.bf16 %v937, %v935
    %v940 = vpack.c.bf16 %v938, %v936
    %v941 = vld [vmem:[#allocation7] sm:$0xf]
    %v942 = vld [vmem:[#allocation7 + $0x4] sm:$0xf]
    %v943 = vld [vmem:[#allocation7 + $0x8] sm:$0xf]
    %v944 = vld [vmem:[#allocation7 + $0xc] sm:$0xf]
    %v945 = vld [vmem:[#allocation7 + $0x10] sm:$0xf]
    %v946 = vld [vmem:[#allocation7 + $0x14] sm:$0xf]
    %v947 = vld [vmem:[#allocation7 + $0x18] sm:$0xf]
    %v948 = vld [vmem:[#allocation7 + $0x1c] sm:$0xf]
    %v949 = vld [vmem:[#allocation7 + $0x20] sm:$0xf]
    %v950 = vld [vmem:[#allocation7 + $0x24] sm:$0xf]
    %v951 = vld [vmem:[#allocation7 + $0x28] sm:$0xf]
    %v952 = vld [vmem:[#allocation7 + $0x2c] sm:$0xf]
    %v953 = vld [vmem:[#allocation7 + $0x30] sm:$0xf]
    %v954 = vld [vmem:[#allocation7 + $0x34] sm:$0xf]
    %v955 = vld [vmem:[#allocation7 + $0x38] sm:$0xf]
    %v956 = vld [vmem:[#allocation7 + $0x3c] sm:$0xf]
    %v957 = vld [vmem:[#allocation7 + $0x40] sm:$0xf]
    %v958 = vld [vmem:[#allocation7 + $0x44] sm:$0xf]
    %v959 = vld [vmem:[#allocation7 + $0x48] sm:$0xf]
    %v960 = vld [vmem:[#allocation7 + $0x4c] sm:$0xf]
    %v961 = vld [vmem:[#allocation7 + $0x50] sm:$0xf]
    %v962 = vld [vmem:[#allocation7 + $0x54] sm:$0xf]
    %v963 = vld [vmem:[#allocation7 + $0x58] sm:$0xf]
    %v964 = vld [vmem:[#allocation7 + $0x5c] sm:$0xf]
    %v965 = vld [vmem:[#allocation7 + $0x60] sm:$0xf]
    %v966 = vld [vmem:[#allocation7 + $0x64] sm:$0xf]
    %v967 = vld [vmem:[#allocation7 + $0x68] sm:$0xf]
    %v968 = vld [vmem:[#allocation7 + $0x6c] sm:$0xf]
    %v969 = vld [vmem:[#allocation7 + $0x70] sm:$0xf]
    %v970 = vld [vmem:[#allocation7 + $0x74] sm:$0xf]
    %v971 = vld [vmem:[#allocation7 + $0x78] sm:$0xf]
    %v972 = vld [vmem:[#allocation7 + $0x7c] sm:$0xf]
    %v973 = vld [vmem:[%s4] sm:$0x1]
    %v975 = vlaneseq
    %v976 = vshrl.u32 %v975, 7
    %v977 = vsub.s32 0, %v976
    %v978 = vrot.slane %v973, %v977
    %v1012 = vunpack.c.l.b16 %v941
    %v1013 = vunpack.c.l.b16 %v942
    %v1014 = vunpack.c.l.b16 %v943
    %v1015 = vunpack.c.l.b16 %v944
    %v1016 = vunpack.c.l.b16 %v945
    %v1017 = vunpack.c.l.b16 %v946
    %v1018 = vunpack.c.l.b16 %v947
    %v1019 = vunpack.c.l.b16 %v948
    %v1020 = vunpack.c.l.b16 %v949
    %v1021 = vunpack.c.l.b16 %v950
    %v1022 = vunpack.c.l.b16 %v951
    %v1023 = vunpack.c.l.b16 %v952
    %v1024 = vunpack.c.l.b16 %v953
    %v1025 = vunpack.c.l.b16 %v954
    %v1026 = vunpack.c.l.b16 %v955
    %v1027 = vunpack.c.l.b16 %v956
    %v1028 = vunpack.c.l.b16 %v957
    %v1029 = vunpack.c.l.b16 %v958
    %v1030 = vunpack.c.l.b16 %v959
    %v1031 = vunpack.c.l.b16 %v960
    %v1032 = vunpack.c.l.b16 %v961
    %v1033 = vunpack.c.l.b16 %v962
    %v1034 = vunpack.c.l.b16 %v963
    %v1035 = vunpack.c.l.b16 %v964
    %v1036 = vunpack.c.l.b16 %v965
    %v1037 = vunpack.c.l.b16 %v966
    %v1038 = vunpack.c.l.b16 %v967
    %v1039 = vunpack.c.l.b16 %v968
    %v1040 = vunpack.c.l.b16 %v969
    %v1041 = vunpack.c.l.b16 %v970
    %v1042 = vunpack.c.l.b16 %v971
    %v1043 = vunpack.c.l.b16 %v972
    %v1044 = vpack.c.b16 %v1013, %v1012
    %v1045 = vpack.c.b16 %v1015, %v1014
    %v1046 = vpack.c.b16 %v1017, %v1016
    %v1047 = vpack.c.b16 %v1019, %v1018
    %v1048 = vpack.c.b16 %v1021, %v1020
    %v1049 = vpack.c.b16 %v1023, %v1022
    %v1050 = vpack.c.b16 %v1025, %v1024
    %v1051 = vpack.c.b16 %v1027, %v1026
    %v1052 = vpack.c.b16 %v1029, %v1028
    %v1053 = vpack.c.b16 %v1031, %v1030
    %v1054 = vpack.c.b16 %v1033, %v1032
    %v1055 = vpack.c.b16 %v1035, %v1034
    %v1056 = vpack.c.b16 %v1037, %v1036
    %v1057 = vpack.c.b16 %v1039, %v1038
    %v1058 = vpack.c.b16 %v1041, %v1040
    %v1059 = vpack.c.b16 %v1043, %v1042
    %1076 = vmatprep.subr.bf16.mxu0 0
    %1077 = vmatpush1.bf16.msra.mxu0 %v1044
    %1078 = vmatprep.subr.bf16.mxu0 0
    %1079 = vmatpush1.bf16.msra.mxu0 %v1045
    %1080 = vmatprep.subr.bf16.mxu0 0
    %1081 = vmatpush1.bf16.msra.mxu0 %v1046
    %1082 = vmatprep.subr.bf16.mxu0 0
    %1083 = vmatpush1.bf16.msra.mxu0 %v1047
    %1084 = vmatprep.subr.bf16.mxu0 0
    %1085 = vmatpush1.bf16.msra.mxu0 %v1048
    %1086 = vmatprep.subr.bf16.mxu0 0
    %1087 = vmatpush1.bf16.msra.mxu0 %v1049
    %1088 = vmatprep.subr.bf16.mxu0 0
    %1089 = vmatpush1.bf16.msra.mxu0 %v1050
    %1090 = vmatprep.subr.bf16.mxu0 0
    %1091 = vmatpush1.bf16.msra.mxu0 %v1051
    %1092 = vmatprep.subr.bf16.mxu0 0
    %1093 = vmatpush1.bf16.msra.mxu0 %v1052
    %1094 = vmatprep.subr.bf16.mxu0 0
    %1095 = vmatpush1.bf16.msra.mxu0 %v1053
    %1096 = vmatprep.subr.bf16.mxu0 0
    %1097 = vmatpush1.bf16.msra.mxu0 %v1054
    %1098 = vmatprep.subr.bf16.mxu0 0
    %1099 = vmatpush1.bf16.msra.mxu0 %v1055
    %1100 = vmatprep.subr.bf16.mxu0 0
    %1101 = vmatpush1.bf16.msra.mxu0 %v1056
    %1102 = vmatprep.subr.bf16.mxu0 0
    %1103 = vmatpush1.bf16.msra.mxu0 %v1057
    %1104 = vmatprep.subr.bf16.mxu0 0
    %1105 = vmatpush1.bf16.msra.mxu0 %v1058
    %1106 = vmatprep.subr.bf16.mxu0 0
    %1107 = vmatpush1.bf16.msra.mxu0 %v1059
    %1108 = vmatprep.mubr.bf16.mxu0 %v940
    %1109 = vmatmul.mubr.bf16.gmra.mrb[0].mxu0 %v939
    %v1110 = vpop.f32.mrb[0].mxu0
    %v1111 = vadd.f32 %v978, %v1110
    %v1112 = vpop.f32.mrb[0].mxu0
    %v1113 = vpop.f32.mrb[0].mxu0
    %v1114 = vadd.f32 %v978, %v1113
    %v1115 = vpop.f32.mrb[0].mxu0
    %1116 = vdwg.mxu0
    %v1117 = vsub.f32 0.0, %v1111
    %v1118 = vsub.f32 0.0, %v1114
    %v1119 = vmul.f32 %v1117, 1.442695
    %v1120 = vpow.pop %v1119
    %v1121 = vmul.f32 %v1118, 1.442695
    %v1122 = vpow.pop %v1121
    %v1123 = vadd.f32 %v1120, 1.0
    %v1124 = vadd.f32 %v1122, 1.0
    %v1125 = vrcp.pop %v1123
    %v1126 = vrcp.pop %v1124
    %v1127 = vpack.c.bf16 %v1126, %v1125
    %v1128 = vld [vmem:[#allocation8] sm:$0xf]
    %v1129 = vld [vmem:[#allocation8 + $0x4] sm:$0xf]
    %v1130 = vld [vmem:[#allocation8 + $0x8] sm:$0xf]
    %v1131 = vld [vmem:[#allocation8 + $0xc] sm:$0xf]
    %v1132 = vld [vmem:[#allocation8 + $0x10] sm:$0xf]
    %v1133 = vld [vmem:[#allocation8 + $0x14] sm:$0xf]
    %v1134 = vld [vmem:[#allocation8 + $0x18] sm:$0xf]
    %v1135 = vld [vmem:[#allocation8 + $0x1c] sm:$0xf]
    %v1136 = vld [vmem:[#allocation8 + $0x20] sm:$0xf]
    %v1137 = vld [vmem:[#allocation8 + $0x24] sm:$0xf]
    %v1138 = vld [vmem:[#allocation8 + $0x28] sm:$0xf]
    %v1139 = vld [vmem:[#allocation8 + $0x2c] sm:$0xf]
    %v1140 = vld [vmem:[#allocation8 + $0x30] sm:$0xf]
    %v1141 = vld [vmem:[#allocation8 + $0x34] sm:$0xf]
    %v1142 = vld [vmem:[#allocation8 + $0x38] sm:$0xf]
    %v1143 = vld [vmem:[#allocation8 + $0x3c] sm:$0xf]
    %v1144 = vld [vmem:[%s6] sm:$0x1]
    %v1146 = vlaneseq
    %v1147 = vshrl.u32 %v1146, 7
    %v1148 = vsub.s32 0, %v1147
    %v1149 = vrot.slane %v1144, %v1148
    %v1167 = vunpack.c.l.b16 %v1128
    %v1168 = vunpack.c.l.b16 %v1129
    %v1169 = vunpack.c.l.b16 %v1130
    %v1170 = vunpack.c.l.b16 %v1131
    %v1171 = vunpack.c.l.b16 %v1132
    %v1172 = vunpack.c.l.b16 %v1133
    %v1173 = vunpack.c.l.b16 %v1134
    %v1174 = vunpack.c.l.b16 %v1135
    %v1175 = vunpack.c.l.b16 %v1136
    %v1176 = vunpack.c.l.b16 %v1137
    %v1177 = vunpack.c.l.b16 %v1138
    %v1178 = vunpack.c.l.b16 %v1139
    %v1179 = vunpack.c.l.b16 %v1140
    %v1180 = vunpack.c.l.b16 %v1141
    %v1181 = vunpack.c.l.b16 %v1142
    %v1182 = vunpack.c.l.b16 %v1143
    %v1183 = vpack.c.b16 %v1168, %v1167
    %v1184 = vpack.c.b16 %v1170, %v1169
    %v1185 = vpack.c.b16 %v1172, %v1171
    %v1186 = vpack.c.b16 %v1174, %v1173
    %v1187 = vpack.c.b16 %v1176, %v1175
    %v1188 = vpack.c.b16 %v1178, %v1177
    %v1189 = vpack.c.b16 %v1180, %v1179
    %v1190 = vpack.c.b16 %v1182, %v1181
    %1199 = vmatprep.subr.bf16.mxu0 0
    %1200 = vmatpush1.bf16.msra.mxu0 %v1183
    %1201 = vmatprep.subr.bf16.mxu0 0
    %1202 = vmatpush1.bf16.msra.mxu0 %v1184
    %1203 = vmatprep.subr.bf16.mxu0 0
    %1204 = vmatpush1.bf16.msra.mxu0 %v1185
    %1205 = vmatprep.subr.bf16.mxu0 0
    %1206 = vmatpush1.bf16.msra.mxu0 %v1186
    %1207 = vmatprep.subr.bf16.mxu0 0
    %1208 = vmatpush1.bf16.msra.mxu0 %v1187
    %1209 = vmatprep.subr.bf16.mxu0 0
    %1210 = vmatpush1.bf16.msra.mxu0 %v1188
    %1211 = vmatprep.subr.bf16.mxu0 0
    %1212 = vmatpush1.bf16.msra.mxu0 %v1189
    %1213 = vmatprep.subr.bf16.mxu0 0
    %1214 = vmatpush1.bf16.msra.mxu0 %v1190
    %1215 = vmatprep.subr.bf16.mxu0 0
    %1216 = vmatpush1.bf16.msra.mxu0 0
    %1217 = vmatprep.subr.bf16.mxu0 0
    %1218 = vmatpush1.bf16.msra.mxu0 0
    %1219 = vmatprep.subr.bf16.mxu0 0
    %1220 = vmatpush1.bf16.msra.mxu0 0
    %1221 = vmatprep.subr.bf16.mxu0 0
    %1222 = vmatpush1.bf16.msra.mxu0 0
    %1223 = vmatprep.subr.bf16.mxu0 0
    %1224 = vmatpush1.bf16.msra.mxu0 0
    %1225 = vmatprep.subr.bf16.mxu0 0
    %1226 = vmatpush1.bf16.msra.mxu0 0
    %1227 = vmatprep.subr.bf16.mxu0 0
    %1228 = vmatpush1.bf16.msra.mxu0 0
    %1229 = vmatprep.subr.bf16.mxu0 0
    %1230 = vmatpush1.bf16.msra.mxu0 0
    %1231 = vmatprep.mubr.bf16.mxu0 0
    %1232 = vmatmul.mubr.bf16.gmra.mrb[0].mxu0 %v1127
    %v1233 = vpop.f32.mrb[0].mxu0
    %v1234 = vadd.f32 %v1149, %v1233
    %v1235 = vpop.f32.mrb[0].mxu0
    %v1236 = vpop.f32.mrb[0].mxu0
    %v1237 = vadd.f32 %v1149, %v1236
    %v1238 = vpop.f32.mrb[0].mxu0
    %1239 = vdwg.mxu0
    %v1240 = vsub.f32 0.0, %v1234
    %v1241 = vsub.f32 0.0, %v1237
    %v1242 = vmul.f32 %v1240, 1.442695
    %v1243 = vpow.pop %v1242
    %v1244 = vmul.f32 %v1241, 1.442695
    %v1245 = vpow.pop %v1244
    %v1246 = vadd.f32 %v1243, 1.0
    %v1247 = vadd.f32 %v1245, 1.0
    %v1248 = vrcp.pop %v1246
    %v1249 = vrcp.pop %v1247
    %v1250 = vpack.c.bf16 %v1249, %v1248
    %v1251 = vld [vmem:[#allocation10] sm:$0xf]
    %v1252 = vld [vmem:[#allocation10 + $0x4] sm:$0xf]
    %v1253 = vld [vmem:[#allocation10 + $0x8] sm:$0xf]
    %v1254 = vld [vmem:[#allocation10 + $0xc] sm:$0xf]
    %v1255 = vld [vmem:[#allocation10 + $0x10] sm:$0xf]
    %v1256 = vld [vmem:[#allocation10 + $0x14] sm:$0xf]
    %v1257 = vld [vmem:[#allocation10 + $0x18] sm:$0xf]
    %v1258 = vld [vmem:[#allocation10 + $0x1c] sm:$0xf]
    %v1259 = vld [vmem:[#allocation10 + $0x20] sm:$0xf]
    %v1260 = vld [vmem:[#allocation10 + $0x24] sm:$0xf]
    %v1261 = vld [vmem:[#allocation10 + $0x28] sm:$0xf]
    %v1262 = vld [vmem:[#allocation10 + $0x2c] sm:$0xf]
    %v1263 = vld [vmem:[#allocation10 + $0x30] sm:$0xf]
    %v1264 = vld [vmem:[#allocation10 + $0x34] sm:$0xf]
    %v1265 = vld [vmem:[#allocation10 + $0x38] sm:$0xf]
    %v1266 = vld [vmem:[#allocation10 + $0x3c] sm:$0xf]
    %v1267 = vld [vmem:[%s8] sm:$0x1]
    %v1269 = vlaneseq
    %v1270 = vshrl.u32 %v1269, 7
    %v1271 = vsub.s32 0, %v1270
    %v1272 = vrot.slane %v1267, %v1271
    %v1290 = vunpack.c.l.b16 %v1251
    %v1291 = vunpack.c.l.b16 %v1252
    %v1292 = vunpack.c.l.b16 %v1253
    %v1293 = vunpack.c.l.b16 %v1254
    %v1294 = vunpack.c.l.b16 %v1255
    %v1295 = vunpack.c.l.b16 %v1256
    %v1296 = vunpack.c.l.b16 %v1257
    %v1297 = vunpack.c.l.b16 %v1258
    %v1298 = vunpack.c.l.b16 %v1259
    %v1299 = vunpack.c.l.b16 %v1260
    %v1300 = vunpack.c.l.b16 %v1261
    %v1301 = vunpack.c.l.b16 %v1262
    %v1302 = vunpack.c.l.b16 %v1263
    %v1303 = vunpack.c.l.b16 %v1264
    %v1304 = vunpack.c.l.b16 %v1265
    %v1305 = vunpack.c.l.b16 %v1266
    %v1306 = vpack.c.b16 %v1291, %v1290
    %v1307 = vpack.c.b16 %v1293, %v1292
    %v1308 = vpack.c.b16 %v1295, %v1294
    %v1309 = vpack.c.b16 %v1297, %v1296
    %v1310 = vpack.c.b16 %v1299, %v1298
    %v1311 = vpack.c.b16 %v1301, %v1300
    %v1312 = vpack.c.b16 %v1303, %v1302
    %v1313 = vpack.c.b16 %v1305, %v1304
    %1322 = vmatprep.subr.bf16.mxu0 0
    %1323 = vmatpush1.bf16.msra.mxu0 %v1306
    %1324 = vmatprep.subr.bf16.mxu0 0
    %1325 = vmatpush1.bf16.msra.mxu0 %v1307
    %1326 = vmatprep.subr.bf16.mxu0 0
    %1327 = vmatpush1.bf16.msra.mxu0 %v1308
    %1328 = vmatprep.subr.bf16.mxu0 0
    %1329 = vmatpush1.bf16.msra.mxu0 %v1309
    %1330 = vmatprep.subr.bf16.mxu0 0
    %1331 = vmatpush1.bf16.msra.mxu0 %v1310
    %1332 = vmatprep.subr.bf16.mxu0 0
    %1333 = vmatpush1.bf16.msra.mxu0 %v1311
    %1334 = vmatprep.subr.bf16.mxu0 0
    %1335 = vmatpush1.bf16.msra.mxu0 %v1312
    %1336 = vmatprep.subr.bf16.mxu0 0
    %1337 = vmatpush1.bf16.msra.mxu0 %v1313
    %1338 = vmatprep.subr.bf16.mxu0 0
    %1339 = vmatpush1.bf16.msra.mxu0 0
    %1340 = vmatprep.subr.bf16.mxu0 0
    %1341 = vmatpush1.bf16.msra.mxu0 0
    %1342 = vmatprep.subr.bf16.mxu0 0
    %1343 = vmatpush1.bf16.msra.mxu0 0
    %1344 = vmatprep.subr.bf16.mxu0 0
    %1345 = vmatpush1.bf16.msra.mxu0 0
    %1346 = vmatprep.subr.bf16.mxu0 0
    %1347 = vmatpush1.bf16.msra.mxu0 0
    %1348 = vmatprep.subr.bf16.mxu0 0
    %1349 = vmatpush1.bf16.msra.mxu0 0
    %1350 = vmatprep.subr.bf16.mxu0 0
    %1351 = vmatpush1.bf16.msra.mxu0 0
    %1352 = vmatprep.subr.bf16.mxu0 0
    %1353 = vmatpush1.bf16.msra.mxu0 0
    %1354 = vmatprep.mubr.bf16.mxu0 0
    %1355 = vmatmul.mubr.bf16.gmra.mrb[0].mxu0 %v1250
    %v1356 = vpop.f32.mrb[0].mxu0
    %v1357 = vadd.f32 %v1272, %v1356
    %v1358 = vpop.f32.mrb[0].mxu0
    %v1359 = vpop.f32.mrb[0].mxu0
    %v1360 = vadd.f32 %v1272, %v1359
    %v1361 = vpop.f32.mrb[0].mxu0
    %1362 = vdwg.mxu0
    %v1363 = vsub.f32 0.0, %v1357
    %v1364 = vsub.f32 0.0, %v1360
    %v1365 = vmul.f32 %v1363, 1.442695
    %v1366 = vpow.pop %v1365
    %v1367 = vmul.f32 %v1364, 1.442695
    %v1368 = vpow.pop %v1367
    %v1369 = vadd.f32 %v1366, 1.0
    %v1370 = vadd.f32 %v1368, 1.0
    %v1371 = vrcp.pop %v1369
    %v1372 = vrcp.pop %v1370
    %v1373 = vpack.c.bf16 %v1372, %v1371
    %v1374 = vld [vmem:[#allocation11] sm:$0xf]
    %v1375 = vld [vmem:[#allocation11 + $0x4] sm:$0xf]
    %v1376 = vld [vmem:[#allocation11 + $0x8] sm:$0xf]
    %v1377 = vld [vmem:[#allocation11 + $0xc] sm:$0xf]
    %v1378 = vld [vmem:[#allocation11 + $0x10] sm:$0xf]
    %v1379 = vld [vmem:[#allocation11 + $0x14] sm:$0xf]
    %v1380 = vld [vmem:[#allocation11 + $0x18] sm:$0xf]
    %v1381 = vld [vmem:[#allocation11 + $0x1c] sm:$0xf]
    %v1382 = vld [vmem:[#allocation11 + $0x20] sm:$0xf]
    %v1383 = vld [vmem:[#allocation11 + $0x24] sm:$0xf]
    %v1384 = vld [vmem:[#allocation11 + $0x28] sm:$0xf]
    %v1385 = vld [vmem:[#allocation11 + $0x2c] sm:$0xf]
    %v1386 = vld [vmem:[#allocation11 + $0x30] sm:$0xf]
    %v1387 = vld [vmem:[#allocation11 + $0x34] sm:$0xf]
    %v1388 = vld [vmem:[#allocation11 + $0x38] sm:$0xf]
    %v1389 = vld [vmem:[#allocation11 + $0x3c] sm:$0xf]
    %v1390 = vld [vmem:[%s10] sm:$0x1]
    %v1392 = vlaneseq
    %v1393 = vshrl.u32 %v1392, 7
    %v1394 = vsub.s32 0, %v1393
    %v1395 = vrot.slane %v1390, %v1394
    %v1413 = vunpack.c.l.b16 %v1374
    %v1414 = vunpack.c.l.b16 %v1375
    %v1415 = vunpack.c.l.b16 %v1376
    %v1416 = vunpack.c.l.b16 %v1377
    %v1417 = vunpack.c.l.b16 %v1378
    %v1418 = vunpack.c.l.b16 %v1379
    %v1419 = vunpack.c.l.b16 %v1380
    %v1420 = vunpack.c.l.b16 %v1381
    %v1421 = vunpack.c.l.b16 %v1382
    %v1422 = vunpack.c.l.b16 %v1383
    %v1423 = vunpack.c.l.b16 %v1384
    %v1424 = vunpack.c.l.b16 %v1385
    %v1425 = vunpack.c.l.b16 %v1386
    %v1426 = vunpack.c.l.b16 %v1387
    %v1427 = vunpack.c.l.b16 %v1388
    %v1428 = vunpack.c.l.b16 %v1389
    %v1429 = vpack.c.b16 %v1414, %v1413
    %v1430 = vpack.c.b16 %v1416, %v1415
    %v1431 = vpack.c.b16 %v1418, %v1417
    %v1432 = vpack.c.b16 %v1420, %v1419
    %v1433 = vpack.c.b16 %v1422, %v1421
    %v1434 = vpack.c.b16 %v1424, %v1423
    %v1435 = vpack.c.b16 %v1426, %v1425
    %v1436 = vpack.c.b16 %v1428, %v1427
    %1445 = vmatprep.subr.bf16.mxu0 0
    %1446 = vmatpush1.bf16.msra.mxu0 %v1429
    %1447 = vmatprep.subr.bf16.mxu0 0
    %1448 = vmatpush1.bf16.msra.mxu0 %v1430
    %1449 = vmatprep.subr.bf16.mxu0 0
    %1450 = vmatpush1.bf16.msra.mxu0 %v1431
    %1451 = vmatprep.subr.bf16.mxu0 0
    %1452 = vmatpush1.bf16.msra.mxu0 %v1432
    %1453 = vmatprep.subr.bf16.mxu0 0
    %1454 = vmatpush1.bf16.msra.mxu0 %v1433
    %1455 = vmatprep.subr.bf16.mxu0 0
    %1456 = vmatpush1.bf16.msra.mxu0 %v1434
    %1457 = vmatprep.subr.bf16.mxu0 0
    %1458 = vmatpush1.bf16.msra.mxu0 %v1435
    %1459 = vmatprep.subr.bf16.mxu0 0
    %1460 = vmatpush1.bf16.msra.mxu0 %v1436
    %1461 = vmatprep.subr.bf16.mxu0 0
    %1462 = vmatpush1.bf16.msra.mxu0 0
    %1463 = vmatprep.subr.bf16.mxu0 0
    %1464 = vmatpush1.bf16.msra.mxu0 0
    %1465 = vmatprep.subr.bf16.mxu0 0
    %1466 = vmatpush1.bf16.msra.mxu0 0
    %1467 = vmatprep.subr.bf16.mxu0 0
    %1468 = vmatpush1.bf16.msra.mxu0 0
    %1469 = vmatprep.subr.bf16.mxu0 0
    %1470 = vmatpush1.bf16.msra.mxu0 0
    %1471 = vmatprep.subr.bf16.mxu0 0
    %1472 = vmatpush1.bf16.msra.mxu0 0
    %1473 = vmatprep.subr.bf16.mxu0 0
    %1474 = vmatpush1.bf16.msra.mxu0 0
    %1475 = vmatprep.subr.bf16.mxu0 0
    %1476 = vmatpush1.bf16.msra.mxu0 0
    %1477 = vmatprep.mubr.bf16.mxu0 0
    %1478 = vmatmul.mubr.bf16.gmra.mrb[0].mxu0 %v1373
    %v1479 = vpop.f32.mrb[0].mxu0
    %v1480 = vadd.f32 %v1395, %v1479
    %v1481 = vpop.f32.mrb[0].mxu0
    %v1482 = vpop.f32.mrb[0].mxu0
    %v1483 = vadd.f32 %v1395, %v1482
    %v1484 = vpop.f32.mrb[0].mxu0
    %1485 = vdwg.mxu0
    %v1486 = vlaneseq
    %v1487 = vand.u32 %v1486, 127
    %vm1488 = vcmp.lt.s32.totalorder %v1487, 10
    %v1489 = vsel %vm1488, %v1480, -inf
    %v1490 = vsel %vm1488, %v1483, -inf
    %1491 = vmax.xlane.f32.xlu0 %v1489
    %v1492 = vpop.xlane.xlu0 %1491
    %1493 = vmax.xlane.f32.xlu0 %v1490
    %v1494 = vpop.xlane.xlu0 %1493
    %v1495 = vsub.f32 %v1489, %v1492
    %v1496 = vsub.f32 %v1490, %v1494
    %v1497 = vmul.f32 %v1495, 1.442695
    %v1498 = vpow.pop %v1497
    %v1499 = vmul.f32 %v1496, 1.442695
    %v1500 = vpow.pop %v1499
    %1501 = vadd.xlane.f32.xlu0 %v1498
    %v1502 = vpop.xlane.xlu0 %1501
    %1503 = vadd.xlane.f32.xlu0 %v1500
    %v1504 = vpop.xlane.xlu0 %1503
    %v1505 = vrcp.pop %v1502
    %v1506 = vrcp.pop %v1504
    %v1507 = vmul.f32 %v1498, %v1505
    %v1508 = vmul.f32 %v1500, %v1506
    %1509 = vst [vmem:[#allocation13] sm:$0xff] %v1507
    %1510 = vst [vmem:[#allocation13 + $0x8] sm:$0xff] %v1508
    // Predicated region
    $region70: #{tpu_custom_call.1} parent=1 // pred_check
      _
    $region71: #{tpu_custom_call.1} parent=1 // pred_check_branch
      %1512 = sbr.rel (0) target = $region73
    $region72: #{tpu_custom_call.1} parent=1 // pred_region
      %s1514 = ssub.s32 256, 256
      %1515 = vsyncadd [#allocation4], %s1514
      %s1516 = sshll.u32 [#allocation13], 4
      %s1517 = int_to_ptr.vmem [resolvable:$true] %s1516
      %1522 = dma.vmem_to_hbm [thread:$0]  %s1517, 256, %s11, [#allocation4], 128, 128, 8
    $region73: #{tpu_custom_call.1} parent=1 // pred_fallthru
      _
    // Predicated region
    $region74: #{tpu_custom_call.1} parent=1 // pred_check
      _
    $region75: #{tpu_custom_call.1} parent=1 // pred_check_branch
      %1524 = sbr.rel (0) target = $region77
    $region76: #{tpu_custom_call.1} parent=1 // pred_region
      %1525 = dma.done [#allocation4], 256
    $region77: #{tpu_custom_call.1} parent=1 // pred_fallthru
      _
    %1526 = vsyncpa [#allocation3], 1
    %1527 = vsyncpa [#allocation6], 1
    %1528 = vsyncpa [#allocation9], 1
    %1529 = vsyncpa [#allocation12], 1
    %1530 = vsyncpa [#allocation4], 1

</llo_original>
